<compile_context>
chip_gen: v7x
topology: tpu7x:2x2x1
jax: 0.10.0
libtpu: 0.0.40
codegen_flags: <defaults>
</compile_context>

<pallas_src>
import functools

import jax
import jax.numpy as jnp
from jax import lax
from jax.experimental import pallas as pl
from jax.experimental.pallas import tpu as pltpu


# ---------------------------------------------------------------------------
# Fused Pallas kernel: conv1(+ReLU) -> conv2(+ReLU) -> conv3(+ReLU)
#                       -> flatten -> linear1(+sigmoid) -> linear2(+sigmoid)
# ---------------------------------------------------------------------------
def _fused_benchmark_kernel(
    x_ref,        # (B, L0, 1)           input, channels-last
    w0_ref,       # (K, C1)              conv1 weight (C_in == 1 squeezed)
    b0_ref,       # (1, C1)
    w1c_ref,      # (K*C1, C2)           conv2 weight, im2col layout
    b1c_ref,      # (1, C2)
    w2c_ref,      # (K*C2, C3)           conv3 weight, im2col layout
    b2c_ref,      # (1, C3)
    wl1_ref,      # (L3*C3, D1)          linear1 weight, rows pre-permuted
    bl1_ref,      # (1, D1)
    wl2_ref,      # (D1, D2)             linear2 weight
    bl2_ref,      # (1, D2)
    o_ref,        # (B, D2)              output
    h1_s,         # VMEM (B, L1, C1)
    c2col_s,      # VMEM (B, L2, K*C1)
    h2_s,         # VMEM (B, L2, C2)
    c3col_s,      # VMEM (B, L3, K*C2)
    h3f_s,        # VMEM (B, L3*C3)      flattened conv3 activations
    *,
    ksize,
    strides,
    l_outs,
    c_outs,
):
    K = ksize
    S0, S1, S2 = strides
    L1, L2, L3 = l_outs
    C1, C2, C3 = c_outs
    B = o_ref.shape[0]

    # ---- conv1 + ReLU: C_in == 1, so do VPU broadcast multiply-adds --------
    acc1 = jnp.zeros((B, L1, C1), jnp.float32)
    for k in range(K):                                  # tiny static tap loop
        xk = x_ref[:, pl.ds(k, L1, S0), :]              # (B, L1, 1) strided window
        wk = w0_ref[pl.ds(k, 1), :]                     # (1, C1)
        acc1 = acc1 + xk * wk[None, :, :]               # (B, L1, C1)
    h1_s[...] = jnp.maximum(acc1 + b0_ref[...][None, :, :], 0.0)

    # ---- conv2 + ReLU: im2col in VMEM, one MXU dot (contraction K*C1) ------
    for k in range(K):
        c2col_s[:, :, pl.ds(k * C1, C1)] = h1_s[:, pl.ds(k, L2, S1), :]
    h2 = jnp.einsum(
        "blk,ko->blo", c2col_s[...], w1c_ref[...],
        preferred_element_type=jnp.float32,
    )
    h2_s[...] = jnp.maximum(h2 + b1c_ref[...][None, :, :], 0.0)

    # ---- conv3 + ReLU: im2col, one MXU dot (contraction K*C2) --------------
    for k in range(K):
        c3col_s[:, :, pl.ds(k * C2, C2)] = h2_s[:, pl.ds(k, L3, S2), :]
    h3 = jnp.einsum(
        "blk,ko->blo", c3col_s[...], w2c_ref[...],
        preferred_element_type=jnp.float32,
    )
    h3 = jnp.maximum(h3 + b2c_ref[...][None, :, :], 0.0)   # (B, L3, C3)

    # ---- flatten (channels-last order; wl1 rows were permuted to match) ----
    for l in range(L3):
        h3f_s[:, pl.ds(l * C3, C3)] = h3[:, l, :]

    # ---- linear1 + sigmoid, linear2 + sigmoid (all VMEM resident) ----------
    y1 = jnp.dot(h3f_s[...], wl1_ref[...], preferred_element_type=jnp.float32)
    y1 = 1.0 / (1.0 + jnp.exp(-(y1 + bl1_ref[...])))
    y2 = jnp.dot(y1, wl2_ref[...], preferred_element_type=jnp.float32)
    o_ref[...] = 1.0 / (1.0 + jnp.exp(-(y2 + bl2_ref[...])))


def _full_spec(shape):
    n = len(shape)
    return pl.BlockSpec(shape, lambda i, _n=n: (0,) * _n)


# ---------------------------------------------------------------------------
# Forward pass (single pallas_call)
# ---------------------------------------------------------------------------
@functools.partial(jax.jit, static_argnames=("strides",))
def benchmark_forward(x, params, *, strides=(2, 2, 2)):
    # x: (B, input_size)   (== the PyTorch input before x.unsqueeze(1))
    (w0, b0), (w1c_raw, b1c), (w2c_raw, b2c) = params["convs"]
    K, _, C1 = w0.shape
    C2 = w1c_raw.shape[2]
    C3 = w2c_raw.shape[2]
    B, L0 = x.shape
    S0, S1, S2 = strides
    L1 = (L0 - K) // S0 + 1
    L2 = (L1 - K) // S1 + 1
    L3 = (L2 - K) // S2 + 1
    D1 = params["w1"].shape[1]
    D2 = params["w2"].shape[1]

    # --- one-time weight re-layouts (outside the kernel) ---------------------
    w0_2d = w0.reshape(K, C1)                       # C_in == 1
    w1c = w1c_raw.reshape(K * C1, C2)               # im2col row order k*C_in + c
    w2c = w2c_raw.reshape(K * C2, C3)
    # fold the PyTorch (B,C,L)-flatten ordering (c*L3 + l) into a row permute
    # so the kernel can flatten channels-last (l*C3 + c) with no transpose:
    wl1 = params["w1"].reshape(C3, L3, D1).transpose(1, 0, 2).reshape(L3 * C3, D1)
    bl1 = params["b1"].reshape(1, D1)
    wl2 = params["w2"]
    bl2 = params["b2"].reshape(1, D2)
    b0r = b0.reshape(1, C1)
    b1r = b1c.reshape(1, C2)
    b2r = b2c.reshape(1, C3)
    x3 = x[:, :, None]                              # (B, L0, 1) channels-last

    kernel = functools.partial(
        _fused_benchmark_kernel,
        ksize=K,
        strides=(S0, S1, S2),
        l_outs=(L1, L2, L3),
        c_outs=(C1, C2, C3),
    )

    in_arrays = (x3, w0_2d, b0r, w1c, b1r, w2c, b2r, wl1, bl1, wl2, bl2)
    return pl.pallas_call(
        kernel,
        out_shape=jax.ShapeDtypeStruct((B, D2), jnp.float32),
        grid=(1,),
        in_specs=[_full_spec(a.shape) for a in in_arrays],
        out_specs=_full_spec((B, D2)),
        scratch_shapes=[
            pltpu.VMEM((B, L1, C1), jnp.float32),
            pltpu.VMEM((B, L2, K * C1), jnp.float32),
            pltpu.VMEM((B, L2, C2), jnp.float32),
            pltpu.VMEM((B, L3, K * C2), jnp.float32),
            pltpu.VMEM((B, L3 * C3), jnp.float32),
        ],
        compiler_params=pltpu.CompilerParams(
            dimension_semantics=("arbitrary",),
        ),
    )(*in_arrays)


# ---------------------------------------------------------------------------
# Parameter construction (deterministic, PyTorch-default-like uniform init)
# ---------------------------------------------------------------------------
def init_params(
    key,
    input_size,
    output_size,
    channels_list=(16, 32, 64),
    kernel_size_list=(3, 3, 3),
    strides=(2, 2, 2),
    out_features=128,
):
    params = {"convs": []}
    c_prev = 1
    dim = input_size
    for c, k, s in zip(channels_list, kernel_size_list, strides):
        key, kw, kb = jax.random.split(key, 3)
        bound = 1.0 / (c_prev * k) ** 0.5
        w = jax.random.uniform(kw, (k, c_prev, c), jnp.float32, -bound, bound)
        b = jax.random.uniform(kb, (c,), jnp.float32, -bound, bound)
        params["convs"].append((w, b))
        c_prev = c
        dim = (dim - k) // s + 1
    linear_dim = dim * channels_list[-1]

    key, kw1, kb1, kw2, kb2 = jax.random.split(key, 5)
    b1 = 1.0 / linear_dim ** 0.5
    params["w1"] = jax.random.uniform(kw1, (linear_dim, out_features), jnp.float32, -b1, b1)
    params["b1"] = jax.random.uniform(kb1, (out_features,), jnp.float32, -b1, b1)
    b2 = 1.0 / out_features ** 0.5
    params["w2"] = jax.random.uniform(kw2, (out_features, output_size), jnp.float32, -b2, b2)
    params["b2"] = jax.random.uniform(kb2, (output_size,), jnp.float32, -b2, b2)
    return params


# ---------------------------------------------------------------------------
# Pure-JAX reference (PyTorch semantics: NCL convs, NCL flatten)
# ---------------------------------------------------------------------------
def reference_forward(x, params, strides=(2, 2, 2)):
    h = x[:, None, :]  # (B, 1, L)  NCL, as in PyTorch
    for (w, b), s in zip(params["convs"], strides):
        w_oik = jnp.transpose(w, (2, 1, 0))  # (C_out, C_in, K)
        h = lax.conv_general_dilated(
            h, w_oik, (s,), "VALID",
            dimension_numbers=("NCH", "OIH", "NCH"),
            precision=lax.Precision.HIGHEST,
        )
        h = jnp.maximum(h + b[None, :, None], 0.0)
    h = h.reshape(h.shape[0], -1)
    h = jax.nn.sigmoid(h @ params["w1"] + params["b1"])
    h = jax.nn.sigmoid(h @ params["w2"] + params["b2"])
    return h


# ---------------------------------------------------------------------------
if __name__ == "__main__":
    key = jax.random.PRNGKey(0)
    B, input_size, output_size = 2, 64, 8

    key, kp, kx = jax.random.split(key, 3)
    params = init_params(kp, input_size, output_size)
    x = jax.random.normal(kx, (B, input_size), jnp.float32)

    out = benchmark_forward(x, params)
    out = jax.block_until_ready(out)
    assert out.shape == (B, output_size), out.shape

    ref = jax.block_until_ready(reference_forward(x, params))
    assert jnp.allclose(out, ref, atol=2e-3, rtol=2e-3), (
        float(jnp.max(jnp.abs(out - ref)))
    )

    print("KERNEL_OK")
</pallas_src>

<mosaic_0001>
module attributes {stable_mosaic.version = 11 : i64} {
  func.func @_fused_benchmark_kernel(%arg0: i32, %arg1: memref<2x64x1xf32, #tpu.memory_space<vmem>>, %arg2: memref<3x16xf32, #tpu.memory_space<vmem>>, %arg3: memref<1x16xf32, #tpu.memory_space<vmem>>, %arg4: memref<48x32xf32, #tpu.memory_space<vmem>>, %arg5: memref<1x32xf32, #tpu.memory_space<vmem>>, %arg6: memref<96x64xf32, #tpu.memory_space<vmem>>, %arg7: memref<1x64xf32, #tpu.memory_space<vmem>>, %arg8: memref<448x128xf32, #tpu.memory_space<vmem>>, %arg9: memref<1x128xf32, #tpu.memory_space<vmem>>, %arg10: memref<128x8xf32, #tpu.memory_space<vmem>>, %arg11: memref<1x8xf32, #tpu.memory_space<vmem>>, %arg12: memref<2x8xf32, #tpu.memory_space<vmem>>, %arg13: memref<2x31x16xf32, #tpu.memory_space<vmem>>, %arg14: memref<2x15x48xf32, #tpu.memory_space<vmem>>, %arg15: memref<2x15x32xf32, #tpu.memory_space<vmem>>, %arg16: memref<2x7x96xf32, #tpu.memory_space<vmem>>, %arg17: memref<2x448xf32, #tpu.memory_space<vmem>>) attributes {dimension_semantics = [#tpu.dimension_semantics<arbitrary>], iteration_bounds = array<i64: 1>, scalar_prefetch = 0 : i64, scratch_operands = 5 : i64, tpu.core_type = #tpu.core_type<tc>, window_params = [{pipeline_mode = #tpu.pipeline_mode<synchronous>, transform_indices = @transform_0, window_bounds = array<i64: 2, 64, 1>}, {pipeline_mode = #tpu.pipeline_mode<synchronous>, transform_indices = @transform_1, window_bounds = array<i64: 3, 16>}, {pipeline_mode = #tpu.pipeline_mode<synchronous>, transform_indices = @transform_2, window_bounds = array<i64: 1, 16>}, {pipeline_mode = #tpu.pipeline_mode<synchronous>, transform_indices = @transform_3, window_bounds = array<i64: 48, 32>}, {pipeline_mode = #tpu.pipeline_mode<synchronous>, transform_indices = @transform_4, window_bounds = array<i64: 1, 32>}, {pipeline_mode = #tpu.pipeline_mode<synchronous>, transform_indices = @transform_5, window_bounds = array<i64: 96, 64>}, {pipeline_mode = #tpu.pipeline_mode<synchronous>, transform_indices = @transform_6, window_bounds = array<i64: 1, 64>}, {pipeline_mode = #tpu.pipeline_mode<synchronous>, transform_indices = @transform_7, window_bounds = array<i64: 448, 128>}, {pipeline_mode = #tpu.pipeline_mode<synchronous>, transform_indices = @transform_8, window_bounds = array<i64: 1, 128>}, {pipeline_mode = #tpu.pipeline_mode<synchronous>, transform_indices = @transform_9, window_bounds = array<i64: 128, 8>}, {pipeline_mode = #tpu.pipeline_mode<synchronous>, transform_indices = @transform_10, window_bounds = array<i64: 1, 8>}, {pipeline_mode = #tpu.pipeline_mode<synchronous>, transform_indices = @transform_11, window_bounds = array<i64: 2, 8>}]} {
    %cst = arith.constant 0.000000e+00 : f32
    %0 = vector.broadcast %cst : f32 to vector<2x31x16xf32>
    %c0 = arith.constant 0 : index
    %c0_0 = arith.constant 0 : index
    %c0_1 = arith.constant 0 : index
    %1 = tpu.strided_load %arg1[%c0, %c0_0, %c0_1] {strides = array<i32: 1, 2, 1>} : memref<2x64x1xf32, #tpu.memory_space<vmem>>, vector<2x31x1xf32>
    %c0_2 = arith.constant 0 : index
    %c0_3 = arith.constant 0 : index
    %2 = vector.load %arg2[%c0_2, %c0_3] : memref<3x16xf32, #tpu.memory_space<vmem>>, vector<1x16xf32>
    %3 = vector.shape_cast %2 : vector<1x16xf32> to vector<1x1x16xf32>
    %4 = vector.broadcast %1 : vector<2x31x1xf32> to vector<2x31x16xf32>
    %5 = vector.broadcast %3 : vector<1x1x16xf32> to vector<2x31x16xf32>
    %6 = arith.mulf %4, %5 : vector<2x31x16xf32>
    %7 = arith.addf %0, %6 : vector<2x31x16xf32>
    %c0_4 = arith.constant 0 : index
    %c1 = arith.constant 1 : index
    %c0_5 = arith.constant 0 : index
    %8 = tpu.strided_load %arg1[%c0_4, %c1, %c0_5] {strides = array<i32: 1, 2, 1>} : memref<2x64x1xf32, #tpu.memory_space<vmem>>, vector<2x31x1xf32>
    %c1_6 = arith.constant 1 : index
    %c0_7 = arith.constant 0 : index
    %9 = vector.load %arg2[%c1_6, %c0_7] : memref<3x16xf32, #tpu.memory_space<vmem>>, vector<1x16xf32>
    %10 = vector.shape_cast %9 : vector<1x16xf32> to vector<1x1x16xf32>
    %11 = vector.broadcast %8 : vector<2x31x1xf32> to vector<2x31x16xf32>
    %12 = vector.broadcast %10 : vector<1x1x16xf32> to vector<2x31x16xf32>
    %13 = arith.mulf %11, %12 : vector<2x31x16xf32>
    %14 = arith.addf %7, %13 : vector<2x31x16xf32>
    %c0_8 = arith.constant 0 : index
    %c2 = arith.constant 2 : index
    %c0_9 = arith.constant 0 : index
    %15 = tpu.strided_load %arg1[%c0_8, %c2, %c0_9] {strides = array<i32: 1, 2, 1>} : memref<2x64x1xf32, #tpu.memory_space<vmem>>, vector<2x31x1xf32>
    %c2_10 = arith.constant 2 : index
    %c0_11 = arith.constant 0 : index
    %16 = vector.load %arg2[%c2_10, %c0_11] : memref<3x16xf32, #tpu.memory_space<vmem>>, vector<1x16xf32>
    %17 = vector.shape_cast %16 : vector<1x16xf32> to vector<1x1x16xf32>
    %18 = vector.broadcast %15 : vector<2x31x1xf32> to vector<2x31x16xf32>
    %19 = vector.broadcast %17 : vector<1x1x16xf32> to vector<2x31x16xf32>
    %20 = arith.mulf %18, %19 : vector<2x31x16xf32>
    %21 = arith.addf %14, %20 : vector<2x31x16xf32>
    %c0_12 = arith.constant 0 : index
    %c0_13 = arith.constant 0 : index
    %22 = vector.load %arg3[%c0_12, %c0_13] : memref<1x16xf32, #tpu.memory_space<vmem>>, vector<1x16xf32>
    %23 = vector.shape_cast %22 : vector<1x16xf32> to vector<1x1x16xf32>
    %24 = vector.broadcast %23 : vector<1x1x16xf32> to vector<2x31x16xf32>
    %25 = arith.addf %21, %24 : vector<2x31x16xf32>
    %cst_14 = arith.constant 0.000000e+00 : f32
    %26 = vector.broadcast %cst_14 : f32 to vector<2x31x16xf32>
    %27 = arith.maximumf %25, %26 : vector<2x31x16xf32>
    %c0_15 = arith.constant 0 : index
    %c0_16 = arith.constant 0 : index
    %c0_17 = arith.constant 0 : index
    %28 = vector.load %arg13[%c0_15, %c0_16, %c0_17] : memref<2x31x16xf32, #tpu.memory_space<vmem>>, vector<2x31x16xf32>
    tpu.vector_store %arg13[%c0_15, %c0_16, %c0_17], %27 {strides = array<i32>} : memref<2x31x16xf32, #tpu.memory_space<vmem>>, vector<2x31x16xf32>,
    %c0_18 = arith.constant 0 : index
    %c0_19 = arith.constant 0 : index
    %c0_20 = arith.constant 0 : index
    %29 = tpu.strided_load %arg13[%c0_18, %c0_19, %c0_20] {strides = array<i32: 1, 2, 1>} : memref<2x31x16xf32, #tpu.memory_space<vmem>>, vector<2x15x16xf32>
    %c0_21 = arith.constant 0 : index
    %c0_22 = arith.constant 0 : index
    %c0_23 = arith.constant 0 : index
    %30 = vector.load %arg14[%c0_21, %c0_22, %c0_23] : memref<2x15x48xf32, #tpu.memory_space<vmem>>, vector<2x15x16xf32>
    tpu.vector_store %arg14[%c0_21, %c0_22, %c0_23], %29 {strides = array<i32>} : memref<2x15x48xf32, #tpu.memory_space<vmem>>, vector<2x15x16xf32>,
    %c0_24 = arith.constant 0 : index
    %c1_25 = arith.constant 1 : index
    %c0_26 = arith.constant 0 : index
    %31 = tpu.strided_load %arg13[%c0_24, %c1_25, %c0_26] {strides = array<i32: 1, 2, 1>} : memref<2x31x16xf32, #tpu.memory_space<vmem>>, vector<2x15x16xf32>
    %c0_27 = arith.constant 0 : index
    %c0_28 = arith.constant 0 : index
    %c16 = arith.constant 16 : index
    %32 = vector.load %arg14[%c0_27, %c0_28, %c16] : memref<2x15x48xf32, #tpu.memory_space<vmem>>, vector<2x15x16xf32>
    tpu.vector_store %arg14[%c0_27, %c0_28, %c16], %31 {strides = array<i32>} : memref<2x15x48xf32, #tpu.memory_space<vmem>>, vector<2x15x16xf32>,
    %c0_29 = arith.constant 0 : index
    %c2_30 = arith.constant 2 : index
    %c0_31 = arith.constant 0 : index
    %33 = tpu.strided_load %arg13[%c0_29, %c2_30, %c0_31] {strides = array<i32: 1, 2, 1>} : memref<2x31x16xf32, #tpu.memory_space<vmem>>, vector<2x15x16xf32>
    %c0_32 = arith.constant 0 : index
    %c0_33 = arith.constant 0 : index
    %c32 = arith.constant 32 : index
    %34 = vector.load %arg14[%c0_32, %c0_33, %c32] : memref<2x15x48xf32, #tpu.memory_space<vmem>>, vector<2x15x16xf32>
    tpu.vector_store %arg14[%c0_32, %c0_33, %c32], %33 {strides = array<i32>} : memref<2x15x48xf32, #tpu.memory_space<vmem>>, vector<2x15x16xf32>,
    %c0_34 = arith.constant 0 : index
    %c0_35 = arith.constant 0 : index
    %c0_36 = arith.constant 0 : index
    %35 = vector.load %arg14[%c0_34, %c0_35, %c0_36] : memref<2x15x48xf32, #tpu.memory_space<vmem>>, vector<2x15x48xf32>
    %c0_37 = arith.constant 0 : index
    %c0_38 = arith.constant 0 : index
    %36 = vector.load %arg4[%c0_37, %c0_38] : memref<48x32xf32, #tpu.memory_space<vmem>>, vector<48x32xf32>
    "tpu.trace_start"() <{level = 10 : i32, message = "blk,ko->blo"}> : () -> ()
    %cst_39 = arith.constant dense<0.000000e+00> : vector<2x15x32xf32>
    %37 = tpu.matmul %35, %36, %cst_39 {dimension_numbers = #tpu.dot_dimension_numbers<[2], [0], [0, 1], [1], [0, 0, 0, 1, 1, 1], [], []>} : vector<2x15x48xf32>, vector<48x32xf32>, vector<2x15x32xf32> -> vector<2x15x32xf32>
    "tpu.trace_stop"() : () -> ()
    %c0_40 = arith.constant 0 : index
    %c0_41 = arith.constant 0 : index
    %38 = vector.load %arg5[%c0_40, %c0_41] : memref<1x32xf32, #tpu.memory_space<vmem>>, vector<1x32xf32>
    %39 = vector.shape_cast %38 : vector<1x32xf32> to vector<1x1x32xf32>
    %40 = vector.broadcast %39 : vector<1x1x32xf32> to vector<2x15x32xf32>
    %41 = arith.addf %37, %40 : vector<2x15x32xf32>
    %cst_42 = arith.constant 0.000000e+00 : f32
    %42 = vector.broadcast %cst_42 : f32 to vector<2x15x32xf32>
    %43 = arith.maximumf %41, %42 : vector<2x15x32xf32>
    %c0_43 = arith.constant 0 : index
    %c0_44 = arith.constant 0 : index
    %c0_45 = arith.constant 0 : index
    %44 = vector.load %arg15[%c0_43, %c0_44, %c0_45] : memref<2x15x32xf32, #tpu.memory_space<vmem>>, vector<2x15x32xf32>
    tpu.vector_store %arg15[%c0_43, %c0_44, %c0_45], %43 {strides = array<i32>} : memref<2x15x32xf32, #tpu.memory_space<vmem>>, vector<2x15x32xf32>,
    %c0_46 = arith.constant 0 : index
    %c0_47 = arith.constant 0 : index
    %c0_48 = arith.constant 0 : index
    %45 = tpu.strided_load %arg15[%c0_46, %c0_47, %c0_48] {strides = array<i32: 1, 2, 1>} : memref<2x15x32xf32, #tpu.memory_space<vmem>>, vector<2x7x32xf32>
    %c0_49 = arith.constant 0 : index
    %c0_50 = arith.constant 0 : index
    %c0_51 = arith.constant 0 : index
    %46 = vector.load %arg16[%c0_49, %c0_50, %c0_51] : memref<2x7x96xf32, #tpu.memory_space<vmem>>, vector<2x7x32xf32>
    tpu.vector_store %arg16[%c0_49, %c0_50, %c0_51], %45 {strides = array<i32>} : memref<2x7x96xf32, #tpu.memory_space<vmem>>, vector<2x7x32xf32>,
    %c0_52 = arith.constant 0 : index
    %c1_53 = arith.constant 1 : index
    %c0_54 = arith.constant 0 : index
    %47 = tpu.strided_load %arg15[%c0_52, %c1_53, %c0_54] {strides = array<i32: 1, 2, 1>} : memref<2x15x32xf32, #tpu.memory_space<vmem>>, vector<2x7x32xf32>
    %c0_55 = arith.constant 0 : index
    %c0_56 = arith.constant 0 : index
    %c32_57 = arith.constant 32 : index
    %48 = vector.load %arg16[%c0_55, %c0_56, %c32_57] : memref<2x7x96xf32, #tpu.memory_space<vmem>>, vector<2x7x32xf32>
    tpu.vector_store %arg16[%c0_55, %c0_56, %c32_57], %47 {strides = array<i32>} : memref<2x7x96xf32, #tpu.memory_space<vmem>>, vector<2x7x32xf32>,
    %c0_58 = arith.constant 0 : index
    %c2_59 = arith.constant 2 : index
    %c0_60 = arith.constant 0 : index
    %49 = tpu.strided_load %arg15[%c0_58, %c2_59, %c0_60] {strides = array<i32: 1, 2, 1>} : memref<2x15x32xf32, #tpu.memory_space<vmem>>, vector<2x7x32xf32>
    %c0_61 = arith.constant 0 : index
    %c0_62 = arith.constant 0 : index
    %c64 = arith.constant 64 : index
    %50 = vector.load %arg16[%c0_61, %c0_62, %c64] : memref<2x7x96xf32, #tpu.memory_space<vmem>>, vector<2x7x32xf32>
    tpu.vector_store %arg16[%c0_61, %c0_62, %c64], %49 {strides = array<i32>} : memref<2x7x96xf32, #tpu.memory_space<vmem>>, vector<2x7x32xf32>,
    %c0_63 = arith.constant 0 : index
    %c0_64 = arith.constant 0 : index
    %c0_65 = arith.constant 0 : index
    %51 = vector.load %arg16[%c0_63, %c0_64, %c0_65] : memref<2x7x96xf32, #tpu.memory_space<vmem>>, vector<2x7x96xf32>
    %c0_66 = arith.constant 0 : index
    %c0_67 = arith.constant 0 : index
    %52 = vector.load %arg6[%c0_66, %c0_67] : memref<96x64xf32, #tpu.memory_space<vmem>>, vector<96x64xf32>
    "tpu.trace_start"() <{level = 10 : i32, message = "blk,ko->blo"}> : () -> ()
    %cst_68 = arith.constant dense<0.000000e+00> : vector<2x7x64xf32>
    %53 = tpu.matmul %51, %52, %cst_68 {dimension_numbers = #tpu.dot_dimension_numbers<[2], [0], [0, 1], [1], [0, 0, 0, 1, 1, 1], [], []>} : vector<2x7x96xf32>, vector<96x64xf32>, vector<2x7x64xf32> -> vector<2x7x64xf32>
    "tpu.trace_stop"() : () -> ()
    %c0_69 = arith.constant 0 : index
    %c0_70 = arith.constant 0 : index
    %54 = vector.load %arg7[%c0_69, %c0_70] : memref<1x64xf32, #tpu.memory_space<vmem>>, vector<1x64xf32>
    %55 = vector.shape_cast %54 : vector<1x64xf32> to vector<1x1x64xf32>
    %56 = vector.broadcast %55 : vector<1x1x64xf32> to vector<2x7x64xf32>
    %57 = arith.addf %53, %56 : vector<2x7x64xf32>
    %cst_71 = arith.constant 0.000000e+00 : f32
    %58 = vector.broadcast %cst_71 : f32 to vector<2x7x64xf32>
    %59 = arith.maximumf %57, %58 : vector<2x7x64xf32>
    %60 = vector.extract_strided_slice %59 {offsets = [0, 0, 0], sizes = [2, 1, 64], strides = [1, 1, 1]} : vector<2x7x64xf32> to vector<2x1x64xf32>
    %61 = vector.shape_cast %60 : vector<2x1x64xf32> to vector<2x64xf32>
    %c0_72 = arith.constant 0 : index
    %c0_73 = arith.constant 0 : index
    %62 = vector.load %arg17[%c0_72, %c0_73] : memref<2x448xf32, #tpu.memory_space<vmem>>, vector<2x64xf32>
    tpu.vector_store %arg17[%c0_72, %c0_73], %61 {strides = array<i32>} : memref<2x448xf32, #tpu.memory_space<vmem>>, vector<2x64xf32>,
    %63 = vector.extract_strided_slice %59 {offsets = [0, 1, 0], sizes = [2, 1, 64], strides = [1, 1, 1]} : vector<2x7x64xf32> to vector<2x1x64xf32>
    %64 = vector.shape_cast %63 : vector<2x1x64xf32> to vector<2x64xf32>
    %c0_74 = arith.constant 0 : index
    %c64_75 = arith.constant 64 : index
    %65 = vector.load %arg17[%c0_74, %c64_75] : memref<2x448xf32, #tpu.memory_space<vmem>>, vector<2x64xf32>
    tpu.vector_store %arg17[%c0_74, %c64_75], %64 {strides = array<i32>} : memref<2x448xf32, #tpu.memory_space<vmem>>, vector<2x64xf32>,
    %66 = vector.extract_strided_slice %59 {offsets = [0, 2, 0], sizes = [2, 1, 64], strides = [1, 1, 1]} : vector<2x7x64xf32> to vector<2x1x64xf32>
    %67 = vector.shape_cast %66 : vector<2x1x64xf32> to vector<2x64xf32>
    %c0_76 = arith.constant 0 : index
    %c128 = arith.constant 128 : index
    %68 = vector.load %arg17[%c0_76, %c128] : memref<2x448xf32, #tpu.memory_space<vmem>>, vector<2x64xf32>
    tpu.vector_store %arg17[%c0_76, %c128], %67 {strides = array<i32>} : memref<2x448xf32, #tpu.memory_space<vmem>>, vector<2x64xf32>,
    %69 = vector.extract_strided_slice %59 {offsets = [0, 3, 0], sizes = [2, 1, 64], strides = [1, 1, 1]} : vector<2x7x64xf32> to vector<2x1x64xf32>
    %70 = vector.shape_cast %69 : vector<2x1x64xf32> to vector<2x64xf32>
    %c0_77 = arith.constant 0 : index
    %c192 = arith.constant 192 : index
    %71 = vector.load %arg17[%c0_77, %c192] : memref<2x448xf32, #tpu.memory_space<vmem>>, vector<2x64xf32>
    tpu.vector_store %arg17[%c0_77, %c192], %70 {strides = array<i32>} : memref<2x448xf32, #tpu.memory_space<vmem>>, vector<2x64xf32>,
    %72 = vector.extract_strided_slice %59 {offsets = [0, 4, 0], sizes = [2, 1, 64], strides = [1, 1, 1]} : vector<2x7x64xf32> to vector<2x1x64xf32>
    %73 = vector.shape_cast %72 : vector<2x1x64xf32> to vector<2x64xf32>
    %c0_78 = arith.constant 0 : index
    %c256 = arith.constant 256 : index
    %74 = vector.load %arg17[%c0_78, %c256] : memref<2x448xf32, #tpu.memory_space<vmem>>, vector<2x64xf32>
    tpu.vector_store %arg17[%c0_78, %c256], %73 {strides = array<i32>} : memref<2x448xf32, #tpu.memory_space<vmem>>, vector<2x64xf32>,
    %75 = vector.extract_strided_slice %59 {offsets = [0, 5, 0], sizes = [2, 1, 64], strides = [1, 1, 1]} : vector<2x7x64xf32> to vector<2x1x64xf32>
    %76 = vector.shape_cast %75 : vector<2x1x64xf32> to vector<2x64xf32>
    %c0_79 = arith.constant 0 : index
    %c320 = arith.constant 320 : index
    %77 = vector.load %arg17[%c0_79, %c320] : memref<2x448xf32, #tpu.memory_space<vmem>>, vector<2x64xf32>
    tpu.vector_store %arg17[%c0_79, %c320], %76 {strides = array<i32>} : memref<2x448xf32, #tpu.memory_space<vmem>>, vector<2x64xf32>,
    %78 = vector.extract_strided_slice %59 {offsets = [0, 6, 0], sizes = [2, 1, 64], strides = [1, 1, 1]} : vector<2x7x64xf32> to vector<2x1x64xf32>
    %79 = vector.shape_cast %78 : vector<2x1x64xf32> to vector<2x64xf32>
    %c0_80 = arith.constant 0 : index
    %c384 = arith.constant 384 : index
    %80 = vector.load %arg17[%c0_80, %c384] : memref<2x448xf32, #tpu.memory_space<vmem>>, vector<2x64xf32>
    tpu.vector_store %arg17[%c0_80, %c384], %79 {strides = array<i32>} : memref<2x448xf32, #tpu.memory_space<vmem>>, vector<2x64xf32>,
    %c0_81 = arith.constant 0 : index
    %c0_82 = arith.constant 0 : index
    %81 = vector.load %arg17[%c0_81, %c0_82] : memref<2x448xf32, #tpu.memory_space<vmem>>, vector<2x448xf32>
    %c0_83 = arith.constant 0 : index
    %c0_84 = arith.constant 0 : index
    %82 = vector.load %arg8[%c0_83, %c0_84] : memref<448x128xf32, #tpu.memory_space<vmem>>, vector<448x128xf32>
    %cst_85 = arith.constant dense<0.000000e+00> : vector<2x128xf32>
    %83 = tpu.matmul %81, %82, %cst_85 {dimension_numbers = #tpu.dot_dimension_numbers<[1], [0], [0], [1], [0, 0, 1, 1], [], []>} : vector<2x448xf32>, vector<448x128xf32>, vector<2x128xf32> -> vector<2x128xf32>
    %c0_86 = arith.constant 0 : index
    %c0_87 = arith.constant 0 : index
    %84 = vector.load %arg9[%c0_86, %c0_87] : memref<1x128xf32, #tpu.memory_space<vmem>>, vector<1x128xf32>
    %85 = vector.broadcast %84 : vector<1x128xf32> to vector<2x128xf32>
    %86 = arith.addf %83, %85 : vector<2x128xf32>
    %cst_88 = arith.constant 0.000000e+00 : f32
    %87 = vector.broadcast %cst_88 : f32 to vector<2x128xf32>
    %88 = arith.subf %87, %86 : vector<2x128xf32>
    %89 = math.exp %88 : vector<2x128xf32>
    %cst_89 = arith.constant 1.000000e+00 : f32
    %90 = vector.broadcast %cst_89 : f32 to vector<2x128xf32>
    %91 = arith.addf %90, %89 : vector<2x128xf32>
    %cst_90 = arith.constant 1.000000e+00 : f32
    %92 = vector.broadcast %cst_90 : f32 to vector<2x128xf32>
    %93 = arith.divf %92, %91 : vector<2x128xf32>
    %c0_91 = arith.constant 0 : index
    %c0_92 = arith.constant 0 : index
    %94 = vector.load %arg10[%c0_91, %c0_92] : memref<128x8xf32, #tpu.memory_space<vmem>>, vector<128x8xf32>
    %cst_93 = arith.constant dense<0.000000e+00> : vector<2x8xf32>
    %95 = tpu.matmul %93, %94, %cst_93 {dimension_numbers = #tpu.dot_dimension_numbers<[1], [0], [0], [1], [0, 0, 1, 1], [], []>} : vector<2x128xf32>, vector<128x8xf32>, vector<2x8xf32> -> vector<2x8xf32>
    %c0_94 = arith.constant 0 : index
    %c0_95 = arith.constant 0 : index
    %96 = vector.load %arg11[%c0_94, %c0_95] : memref<1x8xf32, #tpu.memory_space<vmem>>, vector<1x8xf32>
    %97 = vector.broadcast %96 : vector<1x8xf32> to vector<2x8xf32>
    %98 = arith.addf %95, %97 : vector<2x8xf32>
    %cst_96 = arith.constant 0.000000e+00 : f32
    %99 = vector.broadcast %cst_96 : f32 to vector<2x8xf32>
    %100 = arith.subf %99, %98 : vector<2x8xf32>
    %101 = math.exp %100 : vector<2x8xf32>
    %cst_97 = arith.constant 1.000000e+00 : f32
    %102 = vector.broadcast %cst_97 : f32 to vector<2x8xf32>
    %103 = arith.addf %102, %101 : vector<2x8xf32>
    %cst_98 = arith.constant 1.000000e+00 : f32
    %104 = vector.broadcast %cst_98 : f32 to vector<2x8xf32>
    %105 = arith.divf %104, %103 : vector<2x8xf32>
    %c0_99 = arith.constant 0 : index
    %c0_100 = arith.constant 0 : index
    %106 = vector.load %arg12[%c0_99, %c0_100] : memref<2x8xf32, #tpu.memory_space<vmem>>, vector<2x8xf32>
    tpu.vector_store %arg12[%c0_99, %c0_100], %105 {strides = array<i32>} : memref<2x8xf32, #tpu.memory_space<vmem>>, vector<2x8xf32>,
    return
  }
  func.func @transform_0(%arg0: i32) -> (i32, i32, i32) {
    %c0_i32 = arith.constant 0 : i32
    %c0_i32_0 = arith.constant 0 : i32
    %c0_i32_1 = arith.constant 0 : i32
    %c0_i32_2 = arith.constant 0 : i32
    return %c0_i32, %c0_i32_0, %c0_i32_1 : i32, i32, i32
  }
  func.func @transform_1(%arg0: i32) -> (i32, i32) {
    %c0_i32 = arith.constant 0 : i32
    %c0_i32_0 = arith.constant 0 : i32
    %c0_i32_1 = arith.constant 0 : i32
    return %c0_i32, %c0_i32_0 : i32, i32
  }
  func.func @transform_2(%arg0: i32) -> (i32, i32) {
    %c0_i32 = arith.constant 0 : i32
    %c0_i32_0 = arith.constant 0 : i32
    %c0_i32_1 = arith.constant 0 : i32
    return %c0_i32, %c0_i32_0 : i32, i32
  }
  func.func @transform_3(%arg0: i32) -> (i32, i32) {
    %c0_i32 = arith.constant 0 : i32
    %c0_i32_0 = arith.constant 0 : i32
    %c0_i32_1 = arith.constant 0 : i32
    return %c0_i32, %c0_i32_0 : i32, i32
  }
  func.func @transform_4(%arg0: i32) -> (i32, i32) {
    %c0_i32 = arith.constant 0 : i32
    %c0_i32_0 = arith.constant 0 : i32
    %c0_i32_1 = arith.constant 0 : i32
    return %c0_i32, %c0_i32_0 : i32, i32
  }
  func.func @transform_5(%arg0: i32) -> (i32, i32) {
    %c0_i32 = arith.constant 0 : i32
    %c0_i32_0 = arith.constant 0 : i32
    %c0_i32_1 = arith.constant 0 : i32
    return %c0_i32, %c0_i32_0 : i32, i32
  }
  func.func @transform_6(%arg0: i32) -> (i32, i32) {
    %c0_i32 = arith.constant 0 : i32
    %c0_i32_0 = arith.constant 0 : i32
    %c0_i32_1 = arith.constant 0 : i32
    return %c0_i32, %c0_i32_0 : i32, i32
  }
  func.func @transform_7(%arg0: i32) -> (i32, i32) {
    %c0_i32 = arith.constant 0 : i32
    %c0_i32_0 = arith.constant 0 : i32
    %c0_i32_1 = arith.constant 0 : i32
    return %c0_i32, %c0_i32_0 : i32, i32
  }
  func.func @transform_8(%arg0: i32) -> (i32, i32) {
    %c0_i32 = arith.constant 0 : i32
    %c0_i32_0 = arith.constant 0 : i32
    %c0_i32_1 = arith.constant 0 : i32
    return %c0_i32, %c0_i32_0 : i32, i32
  }
  func.func @transform_9(%arg0: i32) -> (i32, i32) {
    %c0_i32 = arith.constant 0 : i32
    %c0_i32_0 = arith.constant 0 : i32
    %c0_i32_1 = arith.constant 0 : i32
    return %c0_i32, %c0_i32_0 : i32, i32
  }
  func.func @transform_10(%arg0: i32) -> (i32, i32) {
    %c0_i32 = arith.constant 0 : i32
    %c0_i32_0 = arith.constant 0 : i32
    %c0_i32_1 = arith.constant 0 : i32
    return %c0_i32, %c0_i32_0 : i32, i32
  }
  func.func @transform_11(%arg0: i32) -> (i32, i32) {
    %c0_i32 = arith.constant 0 : i32
    %c0_i32_0 = arith.constant 0 : i32
    %c0_i32_1 = arith.constant 0 : i32
    return %c0_i32, %c0_i32_0 : i32, i32
  }
}

</mosaic_0001>

<llo_original>
// kernel: benchmark_forward.1
$region0: #{benchmark_forward.1}
  #allocation0 [shape = 'u32[]', space=smem, size = 0x4, offset = 0x4, fixed_abs, tag = 'smem constant byte address 0x4 - core index']
  #allocation1 [shape = 'u32[144,128]{1,0:T(1,128)}', space=vmem, size = 0x12000, scoped, tag = 'internal scratch']
  #allocation2 [shape = 'f32[2,31,16]{2,1,0:T(8,128)}', space=vmem, size = 0x8000, scoped, tag = 'scratch operand']
  #allocation3 [shape = 'f32[2,15,48]{2,1,0:T(8,128)}', space=vmem, size = 0x4000, scoped, tag = 'scratch operand']
  #allocation4 [shape = 'f32[2,15,32]{2,1,0:T(8,128)}', space=vmem, size = 0x4000, scoped, tag = 'scratch operand']
  #allocation5 [shape = 'f32[2,7,96]{2,1,0:T(8,128)}', space=vmem, size = 0x2000, scoped, tag = 'scratch operand']
  #allocation6 [shape = 'f32[2,448]{1,0:T(2,128)}', space=vmem, size = 0x1000, scoped, tag = 'scratch operand']
  %s0 = inlined_call_operand.vmem [shape: f32[2,64,1], index: 0, kind: input, shape index: {}]
  %s1 = inlined_call_operand.vmem [shape: f32[3,16], index: 1, kind: input, shape index: {}]
  %s2 = inlined_call_operand.vmem [shape: f32[1,16], index: 2, kind: input, shape index: {}]
  %s3 = inlined_call_operand.vmem [shape: f32[48,32], index: 3, kind: input, shape index: {}]
  %s4 = inlined_call_operand.vmem [shape: f32[1,32], index: 4, kind: input, shape index: {}]
  %s5 = inlined_call_operand.vmem [shape: f32[96,64], index: 5, kind: input, shape index: {}]
  %s6 = inlined_call_operand.vmem [shape: f32[1,64], index: 6, kind: input, shape index: {}]
  %s7 = inlined_call_operand.vmem [shape: f32[448,128], index: 7, kind: input, shape index: {}]
  %s8 = inlined_call_operand.vmem [shape: f32[1,128], index: 8, kind: input, shape index: {}]
  %s9 = inlined_call_operand.vmem [shape: f32[128,8], index: 9, kind: input, shape index: {}]
  %s10 = inlined_call_operand.vmem [shape: f32[1,8], index: 10, kind: input, shape index: {}]
  %s11 = inlined_call_operand.hbm [shape: f32[2,8], index: 11, kind: output, shape index: {}]
  %s12 = sld [smem:[#allocation0]]
  $region54: #{benchmark_forward.1} parent=0
    _
  %s14 = ssub.s32 1, %s12
  %s15 = scalar_select 0, %s14, %s12
  $region1: #{benchmark_forward.1} parent=0
    #allocation7 [shape = 'u8[1024]{0}', space=vmem, size = 0x400, scoped, tag = 'output window, operand 0, single buffered']
    #allocation8 [shape = 's32[1]{0}', space=sflag, size = 0x4, scoped, tag = 'scoped memory for benchmark_forward.1']
    %16 = vsyncpa [#allocation8], 0
    // Predicated region
    $region2: #{benchmark_forward.1} parent=1 // pred_check
      _
    $region3: #{benchmark_forward.1} parent=1 // pred_check_branch
      %18 = sbr.rel (0) target = $region5
    $region4: #{benchmark_forward.1} parent=1 // pred_region
      _
    $region5: #{benchmark_forward.1} parent=1 // pred_fallthru
      _
    // Predicated region
    $region6: #{benchmark_forward.1} parent=1 // pred_check
      _
    $region7: #{benchmark_forward.1} parent=1 // pred_check_branch
      %20 = sbr.rel (0) target = $region9
    $region8: #{benchmark_forward.1} parent=1 // pred_region
      _
    $region9: #{benchmark_forward.1} parent=1 // pred_fallthru
      _
    // Predicated region
    $region10: #{benchmark_forward.1} parent=1 // pred_check
      _
    $region11: #{benchmark_forward.1} parent=1 // pred_check_branch
      %22 = sbr.rel (0) target = $region13
    $region12: #{benchmark_forward.1} parent=1 // pred_region
      _
    $region13: #{benchmark_forward.1} parent=1 // pred_fallthru
      _
    // Predicated region
    $region14: #{benchmark_forward.1} parent=1 // pred_check
      _
    $region15: #{benchmark_forward.1} parent=1 // pred_check_branch
      %24 = sbr.rel (0) target = $region17
    $region16: #{benchmark_forward.1} parent=1 // pred_region
      _
    $region17: #{benchmark_forward.1} parent=1 // pred_fallthru
      _
    // Predicated region
    $region18: #{benchmark_forward.1} parent=1 // pred_check
      _
    $region19: #{benchmark_forward.1} parent=1 // pred_check_branch
      %26 = sbr.rel (0) target = $region21
    $region20: #{benchmark_forward.1} parent=1 // pred_region
      _
    $region21: #{benchmark_forward.1} parent=1 // pred_fallthru
      _
    // Predicated region
    $region22: #{benchmark_forward.1} parent=1 // pred_check
      _
    $region23: #{benchmark_forward.1} parent=1 // pred_check_branch
      %28 = sbr.rel (0) target = $region25
    $region24: #{benchmark_forward.1} parent=1 // pred_region
      _
    $region25: #{benchmark_forward.1} parent=1 // pred_fallthru
      _
    // Predicated region
    $region26: #{benchmark_forward.1} parent=1 // pred_check
      _
    $region27: #{benchmark_forward.1} parent=1 // pred_check_branch
      %30 = sbr.rel (0) target = $region29
    $region28: #{benchmark_forward.1} parent=1 // pred_region
      _
    $region29: #{benchmark_forward.1} parent=1 // pred_fallthru
      _
    // Predicated region
    $region30: #{benchmark_forward.1} parent=1 // pred_check
      _
    $region31: #{benchmark_forward.1} parent=1 // pred_check_branch
      %32 = sbr.rel (0) target = $region33
    $region32: #{benchmark_forward.1} parent=1 // pred_region
      _
    $region33: #{benchmark_forward.1} parent=1 // pred_fallthru
      _
    // Predicated region
    $region34: #{benchmark_forward.1} parent=1 // pred_check
      _
    $region35: #{benchmark_forward.1} parent=1 // pred_check_branch
      %34 = sbr.rel (0) target = $region37
    $region36: #{benchmark_forward.1} parent=1 // pred_region
      _
    $region37: #{benchmark_forward.1} parent=1 // pred_fallthru
      _
    // Predicated region
    $region38: #{benchmark_forward.1} parent=1 // pred_check
      _
    $region39: #{benchmark_forward.1} parent=1 // pred_check_branch
      %36 = sbr.rel (0) target = $region41
    $region40: #{benchmark_forward.1} parent=1 // pred_region
      _
    $region41: #{benchmark_forward.1} parent=1 // pred_fallthru
      _
    // Predicated region
    $region42: #{benchmark_forward.1} parent=1 // pred_check
      _
    $region43: #{benchmark_forward.1} parent=1 // pred_check_branch
      %38 = sbr.rel (0) target = $region45
    $region44: #{benchmark_forward.1} parent=1 // pred_region
      _
    $region45: #{benchmark_forward.1} parent=1 // pred_fallthru
      _
    %v39 = vld [vmem:[%s0] ss:$2 sm:$0xff]
    %s40 = scalar_lea.vmem %s0, 16
    %v41 = vld [vmem:[%s40] ss:$2 sm:$0xff]
    %s42 = scalar_lea.vmem %s0, 32
    %v43 = vld [vmem:[%s42] ss:$2 sm:$0xff]
    %s44 = scalar_lea.vmem %s0, 48
    %v45 = vld [vmem:[%s44] ss:$2 sm:$0x7f]
    %s46 = scalar_lea.vmem %s0, 64
    %v47 = vld [vmem:[%s46] ss:$2 sm:$0xff]
    %s48 = scalar_lea.vmem %s0, 80
    %v49 = vld [vmem:[%s48] ss:$2 sm:$0xff]
    %s50 = scalar_lea.vmem %s0, 96
    %v51 = vld [vmem:[%s50] ss:$2 sm:$0xff]
    %s52 = scalar_lea.vmem %s0, 112
    %v53 = vld [vmem:[%s52] ss:$2 sm:$0x7f]
    %v54 = vld [vmem:[%s1] sm:$0x1]
    %56 = vset.pattern.permute.xlu0 0
    %57 = vperm.xlu0 %56, %v39
    %v58 = vpop.permute.xlu0 %57
    %61 = vset.pattern.permute.xlu0 0
    %62 = vperm.xlu0 %61, %v41
    %v63 = vpop.permute.xlu0 %62
    %66 = vset.pattern.permute.xlu0 0
    %67 = vperm.xlu0 %66, %v43
    %v68 = vpop.permute.xlu0 %67
    %71 = vset.pattern.permute.xlu0 0
    %72 = vperm.xlu0 %71, %v45
    %v73 = vpop.permute.xlu0 %72
    %76 = vset.pattern.permute.xlu0 0
    %77 = vperm.xlu0 %76, %v47
    %v78 = vpop.permute.xlu0 %77
    %81 = vset.pattern.permute.xlu0 0
    %82 = vperm.xlu0 %81, %v49
    %v83 = vpop.permute.xlu0 %82
    %86 = vset.pattern.permute.xlu0 0
    %87 = vperm.xlu0 %86, %v51
    %v88 = vpop.permute.xlu0 %87
    %91 = vset.pattern.permute.xlu0 0
    %92 = vperm.xlu0 %91, %v53
    %v93 = vpop.permute.xlu0 %92
    %v95 = vlaneseq
    %v96 = vshrl.u32 %v95, 7
    %v97 = vsub.s32 0, %v96
    %v98 = vrot.slane %v54, %v97
    %v99 = vmul.f32 %v58, %v98
    %v100 = vmul.f32 %v63, %v98
    %v101 = vmul.f32 %v68, %v98
    %v102 = vmul.f32 %v73, %v98
    %v103 = vmul.f32 %v78, %v98
    %v104 = vmul.f32 %v83, %v98
    %v105 = vmul.f32 %v88, %v98
    %v106 = vmul.f32 %v93, %v98
    %v107 = vadd.f32 %v99, 0.0
    %v108 = vadd.f32 %v100, 0.0
    %v109 = vadd.f32 %v101, 0.0
    %v110 = vadd.f32 %v102, 0.0
    %v111 = vadd.f32 %v103, 0.0
    %v112 = vadd.f32 %v104, 0.0
    %v113 = vadd.f32 %v105, 0.0
    %v114 = vadd.f32 %v106, 0.0
    %s115 = scalar_lea.vmem %s0, 1
    %v116 = vld [vmem:[%s115] ss:$2 sm:$0xff]
    %s117 = scalar_lea.vmem %s0, 17
    %v118 = vld [vmem:[%s117] ss:$2 sm:$0xff]
    %s119 = scalar_lea.vmem %s0, 33
    %v120 = vld [vmem:[%s119] ss:$2 sm:$0xff]
    %s121 = scalar_lea.vmem %s0, 49
    %v122 = vld [vmem:[%s121] ss:$2 sm:$0x7f]
    %s123 = scalar_lea.vmem %s0, 65
    %v124 = vld [vmem:[%s123] ss:$2 sm:$0xff]
    %s125 = scalar_lea.vmem %s0, 81
    %v126 = vld [vmem:[%s125] ss:$2 sm:$0xff]
    %s127 = scalar_lea.vmem %s0, 97
    %v128 = vld [vmem:[%s127] ss:$2 sm:$0xff]
    %s129 = scalar_lea.vmem %s0, 113
    %v130 = vld [vmem:[%s129] ss:$2 sm:$0x7f]
    %v131 = vld [vmem:[%s1 + $0x1] sm:$0x1]
    %133 = vset.pattern.permute.xlu0 0
    %134 = vperm.xlu0 %133, %v116
    %v135 = vpop.permute.xlu0 %134
    %138 = vset.pattern.permute.xlu0 0
    %139 = vperm.xlu0 %138, %v118
    %v140 = vpop.permute.xlu0 %139
    %143 = vset.pattern.permute.xlu0 0
    %144 = vperm.xlu0 %143, %v120
    %v145 = vpop.permute.xlu0 %144
    %148 = vset.pattern.permute.xlu0 0
    %149 = vperm.xlu0 %148, %v122
    %v150 = vpop.permute.xlu0 %149
    %153 = vset.pattern.permute.xlu0 0
    %154 = vperm.xlu0 %153, %v124
    %v155 = vpop.permute.xlu0 %154
    %158 = vset.pattern.permute.xlu0 0
    %159 = vperm.xlu0 %158, %v126
    %v160 = vpop.permute.xlu0 %159
    %163 = vset.pattern.permute.xlu0 0
    %164 = vperm.xlu0 %163, %v128
    %v165 = vpop.permute.xlu0 %164
    %168 = vset.pattern.permute.xlu0 0
    %169 = vperm.xlu0 %168, %v130
    %v170 = vpop.permute.xlu0 %169
    %v172 = vlaneseq
    %v173 = vshrl.u32 %v172, 7
    %v174 = vsub.s32 0, %v173
    %v175 = vrot.slane %v131, %v174
    %v176 = vmul.f32 %v135, %v175
    %v177 = vmul.f32 %v140, %v175
    %v178 = vmul.f32 %v145, %v175
    %v179 = vmul.f32 %v150, %v175
    %v180 = vmul.f32 %v155, %v175
    %v181 = vmul.f32 %v160, %v175
    %v182 = vmul.f32 %v165, %v175
    %v183 = vmul.f32 %v170, %v175
    %v184 = vadd.f32 %v107, %v176
    %v185 = vadd.f32 %v108, %v177
    %v186 = vadd.f32 %v109, %v178
    %v187 = vadd.f32 %v110, %v179
    %v188 = vadd.f32 %v111, %v180
    %v189 = vadd.f32 %v112, %v181
    %v190 = vadd.f32 %v113, %v182
    %v191 = vadd.f32 %v114, %v183
    %s192 = scalar_lea.vmem %s0, 2
    %v193 = vld [vmem:[%s192] ss:$2 sm:$0xff]
    %s194 = scalar_lea.vmem %s0, 18
    %v195 = vld [vmem:[%s194] ss:$2 sm:$0xff]
    %s196 = scalar_lea.vmem %s0, 34
    %v197 = vld [vmem:[%s196] ss:$2 sm:$0xff]
    %s198 = scalar_lea.vmem %s0, 50
    %v199 = vld [vmem:[%s198] ss:$2 sm:$0x7f]
    %s200 = scalar_lea.vmem %s0, 66
    %v201 = vld [vmem:[%s200] ss:$2 sm:$0xff]
    %s202 = scalar_lea.vmem %s0, 82
    %v203 = vld [vmem:[%s202] ss:$2 sm:$0xff]
    %s204 = scalar_lea.vmem %s0, 98
    %v205 = vld [vmem:[%s204] ss:$2 sm:$0xff]
    %s206 = scalar_lea.vmem %s0, 114
    %v207 = vld [vmem:[%s206] ss:$2 sm:$0x7f]
    %v208 = vld [vmem:[%s1 + $0x2] sm:$0x1]
    %210 = vset.pattern.permute.xlu0 0
    %211 = vperm.xlu0 %210, %v193
    %v212 = vpop.permute.xlu0 %211
    %215 = vset.pattern.permute.xlu0 0
    %216 = vperm.xlu0 %215, %v195
    %v217 = vpop.permute.xlu0 %216
    %220 = vset.pattern.permute.xlu0 0
    %221 = vperm.xlu0 %220, %v197
    %v222 = vpop.permute.xlu0 %221
    %225 = vset.pattern.permute.xlu0 0
    %226 = vperm.xlu0 %225, %v199
    %v227 = vpop.permute.xlu0 %226
    %230 = vset.pattern.permute.xlu0 0
    %231 = vperm.xlu0 %230, %v201
    %v232 = vpop.permute.xlu0 %231
    %235 = vset.pattern.permute.xlu0 0
    %236 = vperm.xlu0 %235, %v203
    %v237 = vpop.permute.xlu0 %236
    %240 = vset.pattern.permute.xlu0 0
    %241 = vperm.xlu0 %240, %v205
    %v242 = vpop.permute.xlu0 %241
    %245 = vset.pattern.permute.xlu0 0
    %246 = vperm.xlu0 %245, %v207
    %v247 = vpop.permute.xlu0 %246
    %v249 = vlaneseq
    %v250 = vshrl.u32 %v249, 7
    %v251 = vsub.s32 0, %v250
    %v252 = vrot.slane %v208, %v251
    %v253 = vmul.f32 %v212, %v252
    %v254 = vmul.f32 %v217, %v252
    %v255 = vmul.f32 %v222, %v252
    %v256 = vmul.f32 %v227, %v252
    %v257 = vmul.f32 %v232, %v252
    %v258 = vmul.f32 %v237, %v252
    %v259 = vmul.f32 %v242, %v252
    %v260 = vmul.f32 %v247, %v252
    %v261 = vadd.f32 %v184, %v253
    %v262 = vadd.f32 %v185, %v254
    %v263 = vadd.f32 %v186, %v255
    %v264 = vadd.f32 %v187, %v256
    %v265 = vadd.f32 %v188, %v257
    %v266 = vadd.f32 %v189, %v258
    %v267 = vadd.f32 %v190, %v259
    %v268 = vadd.f32 %v191, %v260
    %v269 = vld [vmem:[%s2] sm:$0x1]
    %v271 = vlaneseq
    %v272 = vshrl.u32 %v271, 7
    %v273 = vsub.s32 0, %v272
    %v274 = vrot.slane %v269, %v273
    %v276 = vadd.f32 %v261, %v274
    %v277 = vadd.f32 %v262, %v274
    %v278 = vadd.f32 %v263, %v274
    %v279 = vadd.f32 %v264, %v274
    %v280 = vadd.f32 %v265, %v274
    %v281 = vadd.f32 %v266, %v274
    %v282 = vadd.f32 %v267, %v274
    %v283 = vadd.f32 %v268, %v274
    %v284 = vmax.f32 %v276, 0.0
    %v285 = vmax.f32 %v277, 0.0
    %v286 = vmax.f32 %v278, 0.0
    %v287 = vmax.f32 %v279, 0.0
    %v288 = vmax.f32 %v280, 0.0
    %v289 = vmax.f32 %v281, 0.0
    %v290 = vmax.f32 %v282, 0.0
    %v291 = vmax.f32 %v283, 0.0
    %vm292 = vcmask 130048
    %293 = vst.msk [vmem:[#allocation2] sm:$0xff] %vm292, %v284
    %294 = vst.msk [vmem:[#allocation2 + $0x8] sm:$0xff] %vm292, %v285
    %295 = vst.msk [vmem:[#allocation2 + $0x10] sm:$0xff] %vm292, %v286
    %vm296 = vcmask 129024
    %297 = vst.msk [vmem:[#allocation2 + $0x18] sm:$0x7f] %vm296, %v287
    %298 = vst.msk [vmem:[#allocation2 + $0x20] sm:$0xff] %vm292, %v288
    %299 = vst.msk [vmem:[#allocation2 + $0x28] sm:$0xff] %vm292, %v289
    %300 = vst.msk [vmem:[#allocation2 + $0x30] sm:$0xff] %vm292, %v290
    %301 = vst.msk [vmem:[#allocation2 + $0x38] sm:$0x7f] %vm296, %v291
    %v302 = vld [vmem:[#allocation2] ss:$2 sm:$0xff]
    %s303 = scalar_lea.vmem [#allocation2], 16
    %v304 = vld [vmem:[%s303] ss:$2 sm:$0x7f]
    %s305 = scalar_lea.vmem [#allocation2], 32
    %v306 = vld [vmem:[%s305] ss:$2 sm:$0xff]
    %s307 = scalar_lea.vmem [#allocation2], 48
    %v308 = vld [vmem:[%s307] ss:$2 sm:$0x7f]
    %309 = vst.msk [vmem:[#allocation3] sm:$0xff] %vm292, %v302
    %310 = vst.msk [vmem:[#allocation3 + $0x8] sm:$0x7f] %vm296, %v304
    %311 = vst.msk [vmem:[#allocation3 + $0x10] sm:$0xff] %vm292, %v306
    %312 = vst.msk [vmem:[#allocation3 + $0x18] sm:$0x7f] %vm296, %v308
    %s313 = scalar_lea.vmem [#allocation2], 1
    %v314 = vld [vmem:[%s313] ss:$2 sm:$0xff]
    %s315 = scalar_lea.vmem [#allocation2], 17
    %v316 = vld [vmem:[%s315] ss:$2 sm:$0x7f]
    %s317 = scalar_lea.vmem [#allocation2], 33
    %v318 = vld [vmem:[%s317] ss:$2 sm:$0xff]
    %s319 = scalar_lea.vmem [#allocation2], 49
    %v320 = vld [vmem:[%s319] ss:$2 sm:$0x7f]
    %325 = vrot.lane.b32.xlu0 %v314, 16
    %v326 = vpop.permute.xlu0 %325
    %327 = vrot.lane.b32.xlu0 %v316, 16
    %v328 = vpop.permute.xlu0 %327
    %329 = vrot.lane.b32.xlu0 %v318, 16
    %v330 = vpop.permute.xlu0 %329
    %331 = vrot.lane.b32.xlu0 %v320, 16
    %v332 = vpop.permute.xlu0 %331
    %vm337 = vcmask 261248
    %338 = vst.msk [vmem:[#allocation3] sm:$0xff] %vm337, %v326
    %vm339 = vcmask 260224
    %340 = vst.msk [vmem:[#allocation3 + $0x8] sm:$0x7f] %vm339, %v328
    %341 = vst.msk [vmem:[#allocation3 + $0x10] sm:$0xff] %vm337, %v330
    %342 = vst.msk [vmem:[#allocation3 + $0x18] sm:$0x7f] %vm339, %v332
    %s343 = scalar_lea.vmem [#allocation2], 2
    %v344 = vld [vmem:[%s343] ss:$2 sm:$0xff]
    %s345 = scalar_lea.vmem [#allocation2], 18
    %v346 = vld [vmem:[%s345] ss:$2 sm:$0x7f]
    %s347 = scalar_lea.vmem [#allocation2], 34
    %v348 = vld [vmem:[%s347] ss:$2 sm:$0xff]
    %s349 = scalar_lea.vmem [#allocation2], 50
    %v350 = vld [vmem:[%s349] ss:$2 sm:$0x7f]
    %355 = vrot.lane.b32.xlu0 %v344, 32
    %v356 = vpop.permute.xlu0 %355
    %357 = vrot.lane.b32.xlu0 %v346, 32
    %v358 = vpop.permute.xlu0 %357
    %359 = vrot.lane.b32.xlu0 %v348, 32
    %v360 = vpop.permute.xlu0 %359
    %361 = vrot.lane.b32.xlu0 %v350, 32
    %v362 = vpop.permute.xlu0 %361
    %vm367 = vcmask 392448
    %368 = vst.msk [vmem:[#allocation3] sm:$0xff] %vm367, %v356
    %vm369 = vcmask 391424
    %370 = vst.msk [vmem:[#allocation3 + $0x8] sm:$0x7f] %vm369, %v358
    %371 = vst.msk [vmem:[#allocation3 + $0x10] sm:$0xff] %vm367, %v360
    %372 = vst.msk [vmem:[#allocation3 + $0x18] sm:$0x7f] %vm369, %v362
    %v373 = vld [vmem:[#allocation3] sm:$0xff]
    %v374 = vld [vmem:[#allocation3 + $0x8] sm:$0x7f]
    %v375 = vld [vmem:[#allocation3 + $0x10] sm:$0xff]
    %v376 = vld [vmem:[#allocation3 + $0x18] sm:$0x7f]
    %v377 = vld [vmem:[%s3] sm:$0xff]
    %v378 = vld [vmem:[%s3 + $0x8] sm:$0xff]
    %v379 = vld [vmem:[%s3 + $0x10] sm:$0xff]
    %v380 = vld [vmem:[%s3 + $0x18] sm:$0xff]
    %v381 = vld [vmem:[%s3 + $0x20] sm:$0xff]
    %v382 = vld [vmem:[%s3 + $0x28] sm:$0xff]
    %v383 = vld [vmem:[%s4] sm:$0x1]
    %v385 = vlaneseq
    %v386 = vshrl.u32 %v385, 7
    %v387 = vsub.s32 0, %v386
    %v388 = vrot.slane %v383, %v387
    %v393 = vcombine.high %v373, %v373
    %v395 = vunpack.c.l.s4 1966171168
    %v396 = vunpack.c.0.s8 %v395
    %v397 = vlaneseq
    %v398 = vshrl.u32 %v397, 7
    %v399 = vsub.s32 %v396, %v398
    %v400 = vrot.slane %v373, %v399
    %v402 = vunpack.c.l.s4 1966171168
    %v403 = vunpack.c.0.s8 %v402
    %v404 = vlaneseq
    %v405 = vshrl.u32 %v404, 7
    %v406 = vsub.s32 %v403, %v405
    %v407 = vrot.slane %v393, %v406
    %v408 = vcombine.high %v400, %v400
    %v409 = vcombine.high %v407, %v407
    %v411 = vunpack.c.l.s4 1966171168
    %v412 = vunpack.c.0.s8 %v411
    %v413 = vlaneseq
    %v414 = vshrl.u32 %v413, 7
    %v415 = vsub.s32 %v412, %v414
    %v416 = vrot.slane %v400, %v415
    %v418 = vunpack.c.l.s4 1966171168
    %v419 = vunpack.c.0.s8 %v418
    %v420 = vlaneseq
    %v421 = vshrl.u32 %v420, 7
    %v422 = vsub.s32 %v419, %v421
    %v423 = vrot.slane %v407, %v422
    %v425 = vunpack.c.l.s4 1966171168
    %v426 = vunpack.c.0.s8 %v425
    %v427 = vlaneseq
    %v428 = vshrl.u32 %v427, 7
    %v429 = vsub.s32 %v426, %v428
    %v430 = vrot.slane %v408, %v429
    %v432 = vunpack.c.l.s4 1966171168
    %v433 = vunpack.c.0.s8 %v432
    %v434 = vlaneseq
    %v435 = vshrl.u32 %v434, 7
    %v436 = vsub.s32 %v433, %v435
    %v437 = vrot.slane %v409, %v436
    %v438 = vcombine.high %v416, %v416
    %v439 = vcombine.high %v423, %v423
    %v440 = vcombine.high %v430, %v430
    %v441 = vcombine.high %v437, %v437
    %v442 = vcombine.high %v374, %v374
    %v444 = vunpack.c.l.s4 1966171168
    %v445 = vunpack.c.0.s8 %v444
    %v446 = vlaneseq
    %v447 = vshrl.u32 %v446, 7
    %v448 = vsub.s32 %v445, %v447
    %v449 = vrot.slane %v374, %v448
    %v451 = vunpack.c.l.s4 1966171168
    %v452 = vunpack.c.0.s8 %v451
    %v453 = vlaneseq
    %v454 = vshrl.u32 %v453, 7
    %v455 = vsub.s32 %v452, %v454
    %v456 = vrot.slane %v442, %v455
    %v457 = vcombine.high %v449, %v449
    %v458 = vcombine.high %v456, %v456
    %v460 = vunpack.c.l.s4 1966171168
    %v461 = vunpack.c.0.s8 %v460
    %v462 = vlaneseq
    %v463 = vshrl.u32 %v462, 7
    %v464 = vsub.s32 %v461, %v463
    %v465 = vrot.slane %v449, %v464
    %v467 = vunpack.c.l.s4 1966171168
    %v468 = vunpack.c.0.s8 %v467
    %v469 = vlaneseq
    %v470 = vshrl.u32 %v469, 7
    %v471 = vsub.s32 %v468, %v470
    %v472 = vrot.slane %v456, %v471
    %v474 = vunpack.c.l.s4 1966171168
    %v475 = vunpack.c.0.s8 %v474
    %v476 = vlaneseq
    %v477 = vshrl.u32 %v476, 7
    %v478 = vsub.s32 %v475, %v477
    %v479 = vrot.slane %v457, %v478
    %v481 = vunpack.c.l.s4 1966171168
    %v482 = vunpack.c.0.s8 %v481
    %v483 = vlaneseq
    %v484 = vshrl.u32 %v483, 7
    %v485 = vsub.s32 %v482, %v484
    %v486 = vrot.slane %v458, %v485
    %v487 = vcombine.high %v465, %v465
    %v488 = vcombine.high %v472, %v472
    %v489 = vcombine.high %v479, %v479
    %v490 = vcombine.high %v375, %v375
    %v492 = vunpack.c.l.s4 1966171168
    %v493 = vunpack.c.0.s8 %v492
    %v494 = vlaneseq
    %v495 = vshrl.u32 %v494, 7
    %v496 = vsub.s32 %v493, %v495
    %v497 = vrot.slane %v375, %v496
    %v499 = vunpack.c.l.s4 1966171168
    %v500 = vunpack.c.0.s8 %v499
    %v501 = vlaneseq
    %v502 = vshrl.u32 %v501, 7
    %v503 = vsub.s32 %v500, %v502
    %v504 = vrot.slane %v490, %v503
    %v505 = vcombine.high %v497, %v497
    %v506 = vcombine.high %v504, %v504
    %v508 = vunpack.c.l.s4 1966171168
    %v509 = vunpack.c.0.s8 %v508
    %v510 = vlaneseq
    %v511 = vshrl.u32 %v510, 7
    %v512 = vsub.s32 %v509, %v511
    %v513 = vrot.slane %v497, %v512
    %v515 = vunpack.c.l.s4 1966171168
    %v516 = vunpack.c.0.s8 %v515
    %v517 = vlaneseq
    %v518 = vshrl.u32 %v517, 7
    %v519 = vsub.s32 %v516, %v518
    %v520 = vrot.slane %v504, %v519
    %v522 = vunpack.c.l.s4 1966171168
    %v523 = vunpack.c.0.s8 %v522
    %v524 = vlaneseq
    %v525 = vshrl.u32 %v524, 7
    %v526 = vsub.s32 %v523, %v525
    %v527 = vrot.slane %v505, %v526
    %v529 = vunpack.c.l.s4 1966171168
    %v530 = vunpack.c.0.s8 %v529
    %v531 = vlaneseq
    %v532 = vshrl.u32 %v531, 7
    %v533 = vsub.s32 %v530, %v532
    %v534 = vrot.slane %v506, %v533
    %v535 = vcombine.high %v513, %v513
    %v536 = vcombine.high %v520, %v520
    %v537 = vcombine.high %v527, %v527
    %v538 = vcombine.high %v534, %v534
    %v539 = vcombine.high %v376, %v376
    %v541 = vunpack.c.l.s4 1966171168
    %v542 = vunpack.c.0.s8 %v541
    %v543 = vlaneseq
    %v544 = vshrl.u32 %v543, 7
    %v545 = vsub.s32 %v542, %v544
    %v546 = vrot.slane %v376, %v545
    %v548 = vunpack.c.l.s4 1966171168
    %v549 = vunpack.c.0.s8 %v548
    %v550 = vlaneseq
    %v551 = vshrl.u32 %v550, 7
    %v552 = vsub.s32 %v549, %v551
    %v553 = vrot.slane %v539, %v552
    %v554 = vcombine.high %v546, %v546
    %v555 = vcombine.high %v553, %v553
    %v557 = vunpack.c.l.s4 1966171168
    %v558 = vunpack.c.0.s8 %v557
    %v559 = vlaneseq
    %v560 = vshrl.u32 %v559, 7
    %v561 = vsub.s32 %v558, %v560
    %v562 = vrot.slane %v546, %v561
    %v564 = vunpack.c.l.s4 1966171168
    %v565 = vunpack.c.0.s8 %v564
    %v566 = vlaneseq
    %v567 = vshrl.u32 %v566, 7
    %v568 = vsub.s32 %v565, %v567
    %v569 = vrot.slane %v553, %v568
    %v571 = vunpack.c.l.s4 1966171168
    %v572 = vunpack.c.0.s8 %v571
    %v573 = vlaneseq
    %v574 = vshrl.u32 %v573, 7
    %v575 = vsub.s32 %v572, %v574
    %v576 = vrot.slane %v554, %v575
    %v578 = vunpack.c.l.s4 1966171168
    %v579 = vunpack.c.0.s8 %v578
    %v580 = vlaneseq
    %v581 = vshrl.u32 %v580, 7
    %v582 = vsub.s32 %v579, %v581
    %v583 = vrot.slane %v555, %v582
    %v584 = vcombine.high %v562, %v562
    %v585 = vcombine.high %v569, %v569
    %v586 = vcombine.high %v576, %v576
    %v587 = vcombine.high %v388, %v388
    %v589 = vunpack.c.l.s4 1966171168
    %v590 = vunpack.c.0.s8 %v589
    %v591 = vlaneseq
    %v592 = vshrl.u32 %v591, 7
    %v593 = vsub.s32 %v590, %v592
    %v594 = vrot.slane %v388, %v593
    %v596 = vunpack.c.l.s4 1966171168
    %v597 = vunpack.c.0.s8 %v596
    %v598 = vlaneseq
    %v599 = vshrl.u32 %v598, 7
    %v600 = vsub.s32 %v597, %v599
    %v601 = vrot.slane %v587, %v600
    %v602 = vcombine.high %v594, %v594
    %v603 = vcombine.high %v601, %v601
    %v605 = vunpack.c.l.s4 1966171168
    %v606 = vunpack.c.0.s8 %v605
    %v607 = vlaneseq
    %v608 = vshrl.u32 %v607, 7
    %v609 = vsub.s32 %v606, %v608
    %v610 = vrot.slane %v594, %v609
    %v612 = vunpack.c.l.s4 1966171168
    %v613 = vunpack.c.0.s8 %v612
    %v614 = vlaneseq
    %v615 = vshrl.u32 %v614, 7
    %v616 = vsub.s32 %v613, %v615
    %v617 = vrot.slane %v601, %v616
    %v619 = vunpack.c.l.s4 1966171168
    %v620 = vunpack.c.0.s8 %v619
    %v621 = vlaneseq
    %v622 = vshrl.u32 %v621, 7
    %v623 = vsub.s32 %v620, %v622
    %v624 = vrot.slane %v602, %v623
    %v626 = vunpack.c.l.s4 1966171168
    %v627 = vunpack.c.0.s8 %v626
    %v628 = vlaneseq
    %v629 = vshrl.u32 %v628, 7
    %v630 = vsub.s32 %v627, %v629
    %v631 = vrot.slane %v603, %v630
    %v632 = vcombine.high %v610, %v610
    %v633 = vcombine.high %v617, %v617
    %v634 = vcombine.high %v624, %v624
    %v635 = vcombine.high %v631, %v631
    %v636 = vcombine.low %v416, %v430
    %v637 = vcombine.low %v438, %v440
    %v638 = vcombine.low %v423, %v437
    %v639 = vcombine.low %v439, %v441
    %v641 = vunpack.c.l.s4 1966171168
    %v642 = vunpack.c.0.s8 %v641
    %v643 = vlaneseq
    %v644 = vshrl.u32 %v643, 7
    %v645 = vsub.s32 %v642, %v644
    %v646 = vrot.slane %v636, %v645
    %v648 = vunpack.c.l.s4 1966171168
    %v649 = vunpack.c.0.s8 %v648
    %v650 = vlaneseq
    %v651 = vshrl.u32 %v650, 7
    %v652 = vsub.s32 %v649, %v651
    %v653 = vrot.slane %v637, %v652
    %v655 = vunpack.c.l.s4 1966171168
    %v656 = vunpack.c.0.s8 %v655
    %v657 = vlaneseq
    %v658 = vshrl.u32 %v657, 7
    %v659 = vsub.s32 %v656, %v658
    %v660 = vrot.slane %v638, %v659
    %v662 = vunpack.c.l.s4 1966171168
    %v663 = vunpack.c.0.s8 %v662
    %v664 = vlaneseq
    %v665 = vshrl.u32 %v664, 7
    %v666 = vsub.s32 %v663, %v665
    %v667 = vrot.slane %v639, %v666
    %v668 = vcombine.low %v646, %v653
    %v669 = vcombine.low %v660, %v667
    %v671 = vunpack.c.l.s4 1966171168
    %v672 = vunpack.c.0.s8 %v671
    %v673 = vlaneseq
    %v674 = vshrl.u32 %v673, 7
    %v675 = vsub.s32 %v672, %v674
    %v676 = vrot.slane %v668, %v675
    %v678 = vunpack.c.l.s4 1966171168
    %v679 = vunpack.c.0.s8 %v678
    %v680 = vlaneseq
    %v681 = vshrl.u32 %v680, 7
    %v682 = vsub.s32 %v679, %v681
    %v683 = vrot.slane %v669, %v682
    %v684 = vcombine.low %v676, %v683
    %v685 = vcombine.low %v465, %v479
    %v686 = vcombine.low %v487, %v489
    %v687 = vcombine.low %v472, %v486
    %v688 = vcombine.low %v488, %v513
    %v690 = vunpack.c.l.s4 1966171168
    %v691 = vunpack.c.0.s8 %v690
    %v692 = vlaneseq
    %v693 = vshrl.u32 %v692, 7
    %v694 = vsub.s32 %v691, %v693
    %v695 = vrot.slane %v685, %v694
    %v697 = vunpack.c.l.s4 1966171168
    %v698 = vunpack.c.0.s8 %v697
    %v699 = vlaneseq
    %v700 = vshrl.u32 %v699, 7
    %v701 = vsub.s32 %v698, %v700
    %v702 = vrot.slane %v686, %v701
    %v704 = vunpack.c.l.s4 1966171168
    %v705 = vunpack.c.0.s8 %v704
    %v706 = vlaneseq
    %v707 = vshrl.u32 %v706, 7
    %v708 = vsub.s32 %v705, %v707
    %v709 = vrot.slane %v687, %v708
    %v711 = vunpack.c.l.s4 1966171168
    %v712 = vunpack.c.0.s8 %v711
    %v713 = vlaneseq
    %v714 = vshrl.u32 %v713, 7
    %v715 = vsub.s32 %v712, %v714
    %v716 = vrot.slane %v688, %v715
    %v717 = vcombine.low %v695, %v702
    %v718 = vcombine.low %v709, %v716
    %v720 = vunpack.c.l.s4 1966171168
    %v721 = vunpack.c.0.s8 %v720
    %v722 = vlaneseq
    %v723 = vshrl.u32 %v722, 7
    %v724 = vsub.s32 %v721, %v723
    %v725 = vrot.slane %v717, %v724
    %v727 = vunpack.c.l.s4 1966171168
    %v728 = vunpack.c.0.s8 %v727
    %v729 = vlaneseq
    %v730 = vshrl.u32 %v729, 7
    %v731 = vsub.s32 %v728, %v730
    %v732 = vrot.slane %v718, %v731
    %v733 = vcombine.low %v725, %v732
    %v734 = vcombine.low %v527, %v535
    %v735 = vcombine.low %v537, %v520
    %v736 = vcombine.low %v534, %v536
    %v737 = vcombine.low %v538, %v562
    %v739 = vunpack.c.l.s4 1966171168
    %v740 = vunpack.c.0.s8 %v739
    %v741 = vlaneseq
    %v742 = vshrl.u32 %v741, 7
    %v743 = vsub.s32 %v740, %v742
    %v744 = vrot.slane %v734, %v743
    %v746 = vunpack.c.l.s4 1966171168
    %v747 = vunpack.c.0.s8 %v746
    %v748 = vlaneseq
    %v749 = vshrl.u32 %v748, 7
    %v750 = vsub.s32 %v747, %v749
    %v751 = vrot.slane %v735, %v750
    %v753 = vunpack.c.l.s4 1966171168
    %v754 = vunpack.c.0.s8 %v753
    %v755 = vlaneseq
    %v756 = vshrl.u32 %v755, 7
    %v757 = vsub.s32 %v754, %v756
    %v758 = vrot.slane %v736, %v757
    %v760 = vunpack.c.l.s4 1966171168
    %v761 = vunpack.c.0.s8 %v760
    %v762 = vlaneseq
    %v763 = vshrl.u32 %v762, 7
    %v764 = vsub.s32 %v761, %v763
    %v765 = vrot.slane %v737, %v764
    %v766 = vcombine.low %v744, %v751
    %v767 = vcombine.low %v758, %v765
    %v769 = vunpack.c.l.s4 1966171168
    %v770 = vunpack.c.0.s8 %v769
    %v771 = vlaneseq
    %v772 = vshrl.u32 %v771, 7
    %v773 = vsub.s32 %v770, %v772
    %v774 = vrot.slane %v766, %v773
    %v776 = vunpack.c.l.s4 1966171168
    %v777 = vunpack.c.0.s8 %v776
    %v778 = vlaneseq
    %v779 = vshrl.u32 %v778, 7
    %v780 = vsub.s32 %v777, %v779
    %v781 = vrot.slane %v767, %v780
    %v782 = vcombine.low %v774, %v781
    %v783 = vcombine.low %v576, %v584
    %v784 = vcombine.low %v586, %v569
    %v785 = vcombine.low %v583, %v585
    %v787 = vunpack.c.l.s4 1966171168
    %v788 = vunpack.c.0.s8 %v787
    %v789 = vlaneseq
    %v790 = vshrl.u32 %v789, 7
    %v791 = vsub.s32 %v788, %v790
    %v792 = vrot.slane %v783, %v791
    %v794 = vunpack.c.l.s4 1966171168
    %v795 = vunpack.c.0.s8 %v794
    %v796 = vlaneseq
    %v797 = vshrl.u32 %v796, 7
    %v798 = vsub.s32 %v795, %v797
    %v799 = vrot.slane %v784, %v798
    %v801 = vunpack.c.l.s4 1966171168
    %v802 = vunpack.c.0.s8 %v801
    %v803 = vlaneseq
    %v804 = vshrl.u32 %v803, 7
    %v805 = vsub.s32 %v802, %v804
    %v806 = vrot.slane %v785, %v805
    %v807 = vcombine.low %v792, %v799
    %v809 = vunpack.c.l.s4 1966171168
    %v810 = vunpack.c.0.s8 %v809
    %v811 = vlaneseq
    %v812 = vshrl.u32 %v811, 7
    %v813 = vsub.s32 %v810, %v812
    %v814 = vrot.slane %v807, %v813
    %v816 = vunpack.c.l.s4 1966171168
    %v817 = vunpack.c.0.s8 %v816
    %v818 = vlaneseq
    %v819 = vshrl.u32 %v818, 7
    %v820 = vsub.s32 %v817, %v819
    %v821 = vrot.slane %v806, %v820
    %v822 = vcombine.low %v814, %v821
    %v823 = vcombine.low %v610, %v624
    %v824 = vcombine.low %v632, %v634
    %v825 = vcombine.low %v617, %v631
    %v826 = vcombine.low %v633, %v635
    %v828 = vunpack.c.l.s4 1966171168
    %v829 = vunpack.c.0.s8 %v828
    %v830 = vlaneseq
    %v831 = vshrl.u32 %v830, 7
    %v832 = vsub.s32 %v829, %v831
    %v833 = vrot.slane %v823, %v832
    %v835 = vunpack.c.l.s4 1966171168
    %v836 = vunpack.c.0.s8 %v835
    %v837 = vlaneseq
    %v838 = vshrl.u32 %v837, 7
    %v839 = vsub.s32 %v836, %v838
    %v840 = vrot.slane %v824, %v839
    %v842 = vunpack.c.l.s4 1966171168
    %v843 = vunpack.c.0.s8 %v842
    %v844 = vlaneseq
    %v845 = vshrl.u32 %v844, 7
    %v846 = vsub.s32 %v843, %v845
    %v847 = vrot.slane %v825, %v846
    %v849 = vunpack.c.l.s4 1966171168
    %v850 = vunpack.c.0.s8 %v849
    %v851 = vlaneseq
    %v852 = vshrl.u32 %v851, 7
    %v853 = vsub.s32 %v850, %v852
    %v854 = vrot.slane %v826, %v853
    %v855 = vcombine.low %v833, %v840
    %v856 = vcombine.low %v847, %v854
    %v858 = vunpack.c.l.s4 1966171168
    %v859 = vunpack.c.0.s8 %v858
    %v860 = vlaneseq
    %v861 = vshrl.u32 %v860, 7
    %v862 = vsub.s32 %v859, %v861
    %v863 = vrot.slane %v855, %v862
    %v865 = vunpack.c.l.s4 1966171168
    %v866 = vunpack.c.0.s8 %v865
    %v867 = vlaneseq
    %v868 = vshrl.u32 %v867, 7
    %v869 = vsub.s32 %v866, %v868
    %v870 = vrot.slane %v856, %v869
    %v871 = vcombine.low %v863, %v870
    %v872 = vcombine.low %v633, %v610
    %v874 = vunpack.c.l.s4 1966171168
    %v875 = vunpack.c.0.s8 %v874
    %v876 = vlaneseq
    %v877 = vshrl.u32 %v876, 7
    %v878 = vsub.s32 %v875, %v877
    %v879 = vrot.slane %v872, %v878
    %v880 = vcombine.low %v847, %v879
    %v882 = vunpack.c.l.s4 1966171168
    %v883 = vunpack.c.0.s8 %v882
    %v884 = vlaneseq
    %v885 = vshrl.u32 %v884, 7
    %v886 = vsub.s32 %v883, %v885
    %v887 = vrot.slane %v880, %v886
    %v888 = vcombine.low %v863, %v887
    %v889 = vcombine.low %v624, %v632
    %v890 = vcombine.low %v634, %v617
    %v891 = vcombine.low %v631, %v633
    %v892 = vcombine.low %v635, %v610
    %v894 = vunpack.c.l.s4 1966171168
    %v895 = vunpack.c.0.s8 %v894
    %v896 = vlaneseq
    %v897 = vshrl.u32 %v896, 7
    %v898 = vsub.s32 %v895, %v897
    %v899 = vrot.slane %v889, %v898
    %v901 = vunpack.c.l.s4 1966171168
    %v902 = vunpack.c.0.s8 %v901
    %v903 = vlaneseq
    %v904 = vshrl.u32 %v903, 7
    %v905 = vsub.s32 %v902, %v904
    %v906 = vrot.slane %v890, %v905
    %v908 = vunpack.c.l.s4 1966171168
    %v909 = vunpack.c.0.s8 %v908
    %v910 = vlaneseq
    %v911 = vshrl.u32 %v910, 7
    %v912 = vsub.s32 %v909, %v911
    %v913 = vrot.slane %v891, %v912
    %v915 = vunpack.c.l.s4 1966171168
    %v916 = vunpack.c.0.s8 %v915
    %v917 = vlaneseq
    %v918 = vshrl.u32 %v917, 7
    %v919 = vsub.s32 %v916, %v918
    %v920 = vrot.slane %v892, %v919
    %v921 = vcombine.low %v899, %v906
    %v922 = vcombine.low %v913, %v920
    %v924 = vunpack.c.l.s4 1966171168
    %v925 = vunpack.c.0.s8 %v924
    %v926 = vlaneseq
    %v927 = vshrl.u32 %v926, 7
    %v928 = vsub.s32 %v925, %v927
    %v929 = vrot.slane %v921, %v928
    %v931 = vunpack.c.l.s4 1966171168
    %v932 = vunpack.c.0.s8 %v931
    %v933 = vlaneseq
    %v934 = vshrl.u32 %v933, 7
    %v935 = vsub.s32 %v932, %v934
    %v936 = vrot.slane %v922, %v935
    %v937 = vcombine.low %v929, %v936
    %v939 = vunpack.c.l.s4 1966171168
    %v940 = vunpack.c.0.s8 %v939
    %v941 = vlaneseq
    %v942 = vshrl.u32 %v941, 7
    %v943 = vsub.s32 %v940, %v942
    %v944 = vrot.slane %v913, %v943
    %v945 = vcombine.low %v929, %v944
    %vm950 = vcmask 392192
    %v951 = vsel %vm950, %v684, 0
    %v953 = vsel %vm950, %v733, 0
    %v955 = vsel %vm950, %v782, 0
    %v957 = vsel %vm950, %v822, 0
    %959 = vmatprep.subr.mxu0 0.0
    %960 = vmatpush1.msra.mxu0 %v377
    %961 = vmatprep.subr.mxu0 0.0
    %962 = vmatpush1.msra.mxu0 %v378
    %963 = vmatprep.subr.mxu0 0.0
    %964 = vmatpush1.msra.mxu0 %v379
    %965 = vmatprep.subr.mxu0 0.0
    %966 = vmatpush1.msra.mxu0 %v380
    %967 = vmatprep.subr.mxu0 0.0
    %968 = vmatpush1.msra.mxu0 %v381
    %969 = vmatprep.subr.mxu0 0.0
    %970 = vmatpush1.msra.mxu0 %v382
    %971 = vmatprep.subr.mxu0 0.0
    %972 = vmatpush1.msra.mxu0 0.0
    %973 = vmatprep.subr.mxu0 0.0
    %974 = vmatpush1.msra.mxu0 0.0
    %975 = vmatprep.subr.mxu0 0.0
    %976 = vmatpush1.msra.mxu0 0.0
    %977 = vmatprep.subr.mxu0 0.0
    %978 = vmatpush1.msra.mxu0 0.0
    %979 = vmatprep.subr.mxu0 0.0
    %980 = vmatpush1.msra.mxu0 0.0
    %981 = vmatprep.subr.mxu0 0.0
    %982 = vmatpush1.msra.mxu0 0.0
    %983 = vmatprep.subr.mxu0 0.0
    %984 = vmatpush1.msra.mxu0 0.0
    %985 = vmatprep.subr.mxu0 0.0
    %986 = vmatpush1.msra.mxu0 0.0
    %987 = vmatprep.subr.mxu0 0.0
    %988 = vmatpush1.msra.mxu0 0.0
    %989 = vmatprep.subr.mxu0 0.0
    %990 = vmatpush1.msra.mxu0 0.0
    %991 = vmatprep.subr.mxu0 0.0
    %992 = vmatpush1.msra.mxu0 0.0
    %993 = vmatprep.subr.mxu0 0.0
    %994 = vmatpush1.msra.mxu0 0.0
    %995 = vmatprep.subr.mxu0 0.0
    %996 = vmatpush1.msra.mxu0 0.0
    %997 = vmatprep.subr.mxu0 0.0
    %998 = vmatpush1.msra.mxu0 0.0
    %999 = vmatprep.subr.mxu0 0.0
    %1000 = vmatpush1.msra.mxu0 0.0
    %1001 = vmatprep.subr.mxu0 0.0
    %1002 = vmatpush1.msra.mxu0 0.0
    %1003 = vmatprep.subr.mxu0 0.0
    %1004 = vmatpush1.msra.mxu0 0.0
    %1005 = vmatprep.subr.mxu0 0.0
    %1006 = vmatpush1.msra.mxu0 0.0
    %1007 = vmatprep.subr.mxu0 0.0
    %1008 = vmatpush1.msra.mxu0 0.0
    %1009 = vmatprep.subr.mxu0 0.0
    %1010 = vmatpush1.msra.mxu0 0.0
    %1011 = vmatprep.subr.mxu0 0.0
    %1012 = vmatpush1.msra.mxu0 0.0
    %1013 = vmatprep.subr.mxu0 0.0
    %1014 = vmatpush1.msra.mxu0 0.0
    %1015 = vmatprep.subr.mxu0 0.0
    %1016 = vmatpush1.msra.mxu0 0.0
    %1017 = vmatprep.subr.mxu0 0.0
    %1018 = vmatpush1.msra.mxu0 0.0
    %1019 = vmatprep.subr.mxu0 0.0
    %1020 = vmatpush1.msra.mxu0 0.0
    %1021 = vmatprep.subr.mxu0 0.0
    %1022 = vmatpush1.msra.mxu0 0.0
    %1023 = vmatprep.mubr.f32.mxu0 0.0
    %1024 = vmatmul.mubr.f32.gmra.mrb[0].mxu0 %v951
    %v1025 = vpop.f32.mrb[0].mxu0
    %v1026 = vadd.f32 %v871, %v1025
    %v1027 = vpop.f32.mrb[0].mxu0
    %1028 = vmatprep.mubr.f32.mxu0 0.0
    %1029 = vmatmul.mubr.f32.gmra.mrb[0].mxu0 %v953
    %v1030 = vpop.f32.mrb[0].mxu0
    %v1031 = vadd.f32 %v888, %v1030
    %v1032 = vpop.f32.mrb[0].mxu0
    %1033 = vmatprep.mubr.f32.mxu0 0.0
    %1034 = vmatmul.mubr.f32.gmra.mrb[0].mxu0 %v955
    %v1035 = vpop.f32.mrb[0].mxu0
    %v1036 = vadd.f32 %v937, %v1035
    %v1037 = vpop.f32.mrb[0].mxu0
    %1038 = vmatprep.mubr.f32.mxu0 0.0
    %1039 = vmatmul.mubr.f32.gmra.mrb[0].mxu0 %v957
    %v1040 = vpop.f32.mrb[0].mxu0
    %v1041 = vadd.f32 %v945, %v1040
    %v1042 = vpop.f32.mrb[0].mxu0
    %1043 = vdwg.mxu0
    %v1048 = vcombine.high %v1026, %v1026
    %v1050 = vunpack.c.l.s4 1966171168
    %v1051 = vunpack.c.0.s8 %v1050
    %v1052 = vlaneseq
    %v1053 = vshrl.u32 %v1052, 7
    %v1054 = vsub.s32 %v1051, %v1053
    %v1055 = vrot.slane %v1026, %v1054
    %v1057 = vunpack.c.l.s4 1966171168
    %v1058 = vunpack.c.0.s8 %v1057
    %v1059 = vlaneseq
    %v1060 = vshrl.u32 %v1059, 7
    %v1061 = vsub.s32 %v1058, %v1060
    %v1062 = vrot.slane %v1048, %v1061
    %v1063 = vcombine.high %v1055, %v1055
    %v1064 = vcombine.high %v1062, %v1062
    %v1066 = vunpack.c.l.s4 1966171168
    %v1067 = vunpack.c.0.s8 %v1066
    %v1068 = vlaneseq
    %v1069 = vshrl.u32 %v1068, 7
    %v1070 = vsub.s32 %v1067, %v1069
    %v1071 = vrot.slane %v1055, %v1070
    %v1073 = vunpack.c.l.s4 1966171168
    %v1074 = vunpack.c.0.s8 %v1073
    %v1075 = vlaneseq
    %v1076 = vshrl.u32 %v1075, 7
    %v1077 = vsub.s32 %v1074, %v1076
    %v1078 = vrot.slane %v1062, %v1077
    %v1080 = vunpack.c.l.s4 1966171168
    %v1081 = vunpack.c.0.s8 %v1080
    %v1082 = vlaneseq
    %v1083 = vshrl.u32 %v1082, 7
    %v1084 = vsub.s32 %v1081, %v1083
    %v1085 = vrot.slane %v1063, %v1084
    %v1087 = vunpack.c.l.s4 1966171168
    %v1088 = vunpack.c.0.s8 %v1087
    %v1089 = vlaneseq
    %v1090 = vshrl.u32 %v1089, 7
    %v1091 = vsub.s32 %v1088, %v1090
    %v1092 = vrot.slane %v1064, %v1091
    %v1093 = vcombine.high %v1071, %v1071
    %v1094 = vcombine.high %v1078, %v1078
    %v1095 = vcombine.high %v1085, %v1085
    %v1096 = vcombine.high %v1092, %v1092
    %v1097 = vcombine.high %v1031, %v1031
    %v1099 = vunpack.c.l.s4 1966171168
    %v1100 = vunpack.c.0.s8 %v1099
    %v1101 = vlaneseq
    %v1102 = vshrl.u32 %v1101, 7
    %v1103 = vsub.s32 %v1100, %v1102
    %v1104 = vrot.slane %v1031, %v1103
    %v1106 = vunpack.c.l.s4 1966171168
    %v1107 = vunpack.c.0.s8 %v1106
    %v1108 = vlaneseq
    %v1109 = vshrl.u32 %v1108, 7
    %v1110 = vsub.s32 %v1107, %v1109
    %v1111 = vrot.slane %v1097, %v1110
    %v1112 = vcombine.high %v1104, %v1104
    %v1113 = vcombine.high %v1111, %v1111
    %v1115 = vunpack.c.l.s4 1966171168
    %v1116 = vunpack.c.0.s8 %v1115
    %v1117 = vlaneseq
    %v1118 = vshrl.u32 %v1117, 7
    %v1119 = vsub.s32 %v1116, %v1118
    %v1120 = vrot.slane %v1104, %v1119
    %v1122 = vunpack.c.l.s4 1966171168
    %v1123 = vunpack.c.0.s8 %v1122
    %v1124 = vlaneseq
    %v1125 = vshrl.u32 %v1124, 7
    %v1126 = vsub.s32 %v1123, %v1125
    %v1127 = vrot.slane %v1111, %v1126
    %v1129 = vunpack.c.l.s4 1966171168
    %v1130 = vunpack.c.0.s8 %v1129
    %v1131 = vlaneseq
    %v1132 = vshrl.u32 %v1131, 7
    %v1133 = vsub.s32 %v1130, %v1132
    %v1134 = vrot.slane %v1112, %v1133
    %v1136 = vunpack.c.l.s4 1966171168
    %v1137 = vunpack.c.0.s8 %v1136
    %v1138 = vlaneseq
    %v1139 = vshrl.u32 %v1138, 7
    %v1140 = vsub.s32 %v1137, %v1139
    %v1141 = vrot.slane %v1113, %v1140
    %v1142 = vcombine.high %v1120, %v1120
    %v1143 = vcombine.high %v1127, %v1127
    %v1144 = vcombine.high %v1134, %v1134
    %v1145 = vcombine.high %v1141, %v1141
    %v1146 = vcombine.high %v1036, %v1036
    %v1148 = vunpack.c.l.s4 1966171168
    %v1149 = vunpack.c.0.s8 %v1148
    %v1150 = vlaneseq
    %v1151 = vshrl.u32 %v1150, 7
    %v1152 = vsub.s32 %v1149, %v1151
    %v1153 = vrot.slane %v1036, %v1152
    %v1155 = vunpack.c.l.s4 1966171168
    %v1156 = vunpack.c.0.s8 %v1155
    %v1157 = vlaneseq
    %v1158 = vshrl.u32 %v1157, 7
    %v1159 = vsub.s32 %v1156, %v1158
    %v1160 = vrot.slane %v1146, %v1159
    %v1161 = vcombine.high %v1153, %v1153
    %v1162 = vcombine.high %v1160, %v1160
    %v1164 = vunpack.c.l.s4 1966171168
    %v1165 = vunpack.c.0.s8 %v1164
    %v1166 = vlaneseq
    %v1167 = vshrl.u32 %v1166, 7
    %v1168 = vsub.s32 %v1165, %v1167
    %v1169 = vrot.slane %v1153, %v1168
    %v1171 = vunpack.c.l.s4 1966171168
    %v1172 = vunpack.c.0.s8 %v1171
    %v1173 = vlaneseq
    %v1174 = vshrl.u32 %v1173, 7
    %v1175 = vsub.s32 %v1172, %v1174
    %v1176 = vrot.slane %v1160, %v1175
    %v1178 = vunpack.c.l.s4 1966171168
    %v1179 = vunpack.c.0.s8 %v1178
    %v1180 = vlaneseq
    %v1181 = vshrl.u32 %v1180, 7
    %v1182 = vsub.s32 %v1179, %v1181
    %v1183 = vrot.slane %v1161, %v1182
    %v1185 = vunpack.c.l.s4 1966171168
    %v1186 = vunpack.c.0.s8 %v1185
    %v1187 = vlaneseq
    %v1188 = vshrl.u32 %v1187, 7
    %v1189 = vsub.s32 %v1186, %v1188
    %v1190 = vrot.slane %v1162, %v1189
    %v1191 = vcombine.high %v1169, %v1169
    %v1192 = vcombine.high %v1176, %v1176
    %v1193 = vcombine.high %v1183, %v1183
    %v1194 = vcombine.high %v1190, %v1190
    %v1195 = vcombine.high %v1041, %v1041
    %v1197 = vunpack.c.l.s4 1966171168
    %v1198 = vunpack.c.0.s8 %v1197
    %v1199 = vlaneseq
    %v1200 = vshrl.u32 %v1199, 7
    %v1201 = vsub.s32 %v1198, %v1200
    %v1202 = vrot.slane %v1041, %v1201
    %v1204 = vunpack.c.l.s4 1966171168
    %v1205 = vunpack.c.0.s8 %v1204
    %v1206 = vlaneseq
    %v1207 = vshrl.u32 %v1206, 7
    %v1208 = vsub.s32 %v1205, %v1207
    %v1209 = vrot.slane %v1195, %v1208
    %v1210 = vcombine.high %v1202, %v1202
    %v1211 = vcombine.high %v1209, %v1209
    %v1213 = vunpack.c.l.s4 1966171168
    %v1214 = vunpack.c.0.s8 %v1213
    %v1215 = vlaneseq
    %v1216 = vshrl.u32 %v1215, 7
    %v1217 = vsub.s32 %v1214, %v1216
    %v1218 = vrot.slane %v1202, %v1217
    %v1220 = vunpack.c.l.s4 1966171168
    %v1221 = vunpack.c.0.s8 %v1220
    %v1222 = vlaneseq
    %v1223 = vshrl.u32 %v1222, 7
    %v1224 = vsub.s32 %v1221, %v1223
    %v1225 = vrot.slane %v1209, %v1224
    %v1227 = vunpack.c.l.s4 1966171168
    %v1228 = vunpack.c.0.s8 %v1227
    %v1229 = vlaneseq
    %v1230 = vshrl.u32 %v1229, 7
    %v1231 = vsub.s32 %v1228, %v1230
    %v1232 = vrot.slane %v1210, %v1231
    %v1234 = vunpack.c.l.s4 1966171168
    %v1235 = vunpack.c.0.s8 %v1234
    %v1236 = vlaneseq
    %v1237 = vshrl.u32 %v1236, 7
    %v1238 = vsub.s32 %v1235, %v1237
    %v1239 = vrot.slane %v1211, %v1238
    %v1240 = vcombine.high %v1218, %v1218
    %v1241 = vcombine.high %v1232, %v1232
    %v1272 = vmax.f32 %v1071, 0.0
    %v1273 = vmax.f32 %v1085, 0.0
    %v1274 = vmax.f32 %v1093, 0.0
    %v1275 = vmax.f32 %v1095, 0.0
    %v1276 = vmax.f32 %v1078, 0.0
    %v1277 = vmax.f32 %v1092, 0.0
    %v1278 = vmax.f32 %v1094, 0.0
    %v1279 = vmax.f32 %v1096, 0.0
    %v1280 = vmax.f32 %v1120, 0.0
    %v1281 = vmax.f32 %v1134, 0.0
    %v1282 = vmax.f32 %v1142, 0.0
    %v1283 = vmax.f32 %v1144, 0.0
    %v1284 = vmax.f32 %v1127, 0.0
    %v1285 = vmax.f32 %v1141, 0.0
    %v1286 = vmax.f32 %v1143, 0.0
    %v1287 = vmax.f32 %v1145, 0.0
    %v1288 = vmax.f32 %v1169, 0.0
    %v1289 = vmax.f32 %v1183, 0.0
    %v1290 = vmax.f32 %v1191, 0.0
    %v1291 = vmax.f32 %v1193, 0.0
    %v1292 = vmax.f32 %v1176, 0.0
    %v1293 = vmax.f32 %v1190, 0.0
    %v1294 = vmax.f32 %v1192, 0.0
    %v1295 = vmax.f32 %v1194, 0.0
    %v1296 = vmax.f32 %v1218, 0.0
    %v1297 = vmax.f32 %v1232, 0.0
    %v1298 = vmax.f32 %v1240, 0.0
    %v1299 = vmax.f32 %v1241, 0.0
    %v1300 = vmax.f32 %v1225, 0.0
    %v1301 = vmax.f32 %v1239, 0.0
    %v1332 = vcombine.low %v1272, %v1273
    %v1333 = vcombine.low %v1274, %v1275
    %v1334 = vcombine.low %v1276, %v1277
    %v1335 = vcombine.low %v1278, %v1279
    %v1337 = vunpack.c.l.s4 1966171168
    %v1338 = vunpack.c.0.s8 %v1337
    %v1339 = vlaneseq
    %v1340 = vshrl.u32 %v1339, 7
    %v1341 = vsub.s32 %v1338, %v1340
    %v1342 = vrot.slane %v1332, %v1341
    %v1344 = vunpack.c.l.s4 1966171168
    %v1345 = vunpack.c.0.s8 %v1344
    %v1346 = vlaneseq
    %v1347 = vshrl.u32 %v1346, 7
    %v1348 = vsub.s32 %v1345, %v1347
    %v1349 = vrot.slane %v1333, %v1348
    %v1351 = vunpack.c.l.s4 1966171168
    %v1352 = vunpack.c.0.s8 %v1351
    %v1353 = vlaneseq
    %v1354 = vshrl.u32 %v1353, 7
    %v1355 = vsub.s32 %v1352, %v1354
    %v1356 = vrot.slane %v1334, %v1355
    %v1358 = vunpack.c.l.s4 1966171168
    %v1359 = vunpack.c.0.s8 %v1358
    %v1360 = vlaneseq
    %v1361 = vshrl.u32 %v1360, 7
    %v1362 = vsub.s32 %v1359, %v1361
    %v1363 = vrot.slane %v1335, %v1362
    %v1364 = vcombine.low %v1342, %v1349
    %v1365 = vcombine.low %v1356, %v1363
    %v1367 = vunpack.c.l.s4 1966171168
    %v1368 = vunpack.c.0.s8 %v1367
    %v1369 = vlaneseq
    %v1370 = vshrl.u32 %v1369, 7
    %v1371 = vsub.s32 %v1368, %v1370
    %v1372 = vrot.slane %v1364, %v1371
    %v1374 = vunpack.c.l.s4 1966171168
    %v1375 = vunpack.c.0.s8 %v1374
    %v1376 = vlaneseq
    %v1377 = vshrl.u32 %v1376, 7
    %v1378 = vsub.s32 %v1375, %v1377
    %v1379 = vrot.slane %v1365, %v1378
    %v1380 = vcombine.low %v1372, %v1379
    %v1381 = vcombine.low %v1280, %v1281
    %v1382 = vcombine.low %v1282, %v1283
    %v1383 = vcombine.low %v1284, %v1285
    %v1385 = vunpack.c.l.s4 1966171168
    %v1386 = vunpack.c.0.s8 %v1385
    %v1387 = vlaneseq
    %v1388 = vshrl.u32 %v1387, 7
    %v1389 = vsub.s32 %v1386, %v1388
    %v1390 = vrot.slane %v1381, %v1389
    %v1392 = vunpack.c.l.s4 1966171168
    %v1393 = vunpack.c.0.s8 %v1392
    %v1394 = vlaneseq
    %v1395 = vshrl.u32 %v1394, 7
    %v1396 = vsub.s32 %v1393, %v1395
    %v1397 = vrot.slane %v1382, %v1396
    %v1399 = vunpack.c.l.s4 1966171168
    %v1400 = vunpack.c.0.s8 %v1399
    %v1401 = vlaneseq
    %v1402 = vshrl.u32 %v1401, 7
    %v1403 = vsub.s32 %v1400, %v1402
    %v1404 = vrot.slane %v1383, %v1403
    %v1406 = vunpack.c.l.s4 1966171168
    %v1407 = vunpack.c.0.s8 %v1406
    %v1408 = vlaneseq
    %v1409 = vshrl.u32 %v1408, 7
    %v1410 = vsub.s32 %v1407, %v1409
    %v1411 = vrot.slane %v1286, %v1410
    %v1412 = vcombine.low %v1390, %v1397
    %v1413 = vcombine.low %v1404, %v1411
    %v1415 = vunpack.c.l.s4 1966171168
    %v1416 = vunpack.c.0.s8 %v1415
    %v1417 = vlaneseq
    %v1418 = vshrl.u32 %v1417, 7
    %v1419 = vsub.s32 %v1416, %v1418
    %v1420 = vrot.slane %v1412, %v1419
    %v1422 = vunpack.c.l.s4 1966171168
    %v1423 = vunpack.c.0.s8 %v1422
    %v1424 = vlaneseq
    %v1425 = vshrl.u32 %v1424, 7
    %v1426 = vsub.s32 %v1423, %v1425
    %v1427 = vrot.slane %v1413, %v1426
    %v1428 = vcombine.low %v1420, %v1427
    %v1429 = vcombine.low %v1287, %v1288
    %v1430 = vcombine.low %v1289, %v1290
    %v1431 = vcombine.low %v1291, %v1292
    %v1432 = vcombine.low %v1293, %v1294
    %v1434 = vunpack.c.l.s4 1966171168
    %v1435 = vunpack.c.0.s8 %v1434
    %v1436 = vlaneseq
    %v1437 = vshrl.u32 %v1436, 7
    %v1438 = vsub.s32 %v1435, %v1437
    %v1439 = vrot.slane %v1429, %v1438
    %v1441 = vunpack.c.l.s4 1966171168
    %v1442 = vunpack.c.0.s8 %v1441
    %v1443 = vlaneseq
    %v1444 = vshrl.u32 %v1443, 7
    %v1445 = vsub.s32 %v1442, %v1444
    %v1446 = vrot.slane %v1430, %v1445
    %v1448 = vunpack.c.l.s4 1966171168
    %v1449 = vunpack.c.0.s8 %v1448
    %v1450 = vlaneseq
    %v1451 = vshrl.u32 %v1450, 7
    %v1452 = vsub.s32 %v1449, %v1451
    %v1453 = vrot.slane %v1431, %v1452
    %v1455 = vunpack.c.l.s4 1966171168
    %v1456 = vunpack.c.0.s8 %v1455
    %v1457 = vlaneseq
    %v1458 = vshrl.u32 %v1457, 7
    %v1459 = vsub.s32 %v1456, %v1458
    %v1460 = vrot.slane %v1432, %v1459
    %v1461 = vcombine.low %v1439, %v1446
    %v1462 = vcombine.low %v1453, %v1460
    %v1464 = vunpack.c.l.s4 1966171168
    %v1465 = vunpack.c.0.s8 %v1464
    %v1466 = vlaneseq
    %v1467 = vshrl.u32 %v1466, 7
    %v1468 = vsub.s32 %v1465, %v1467
    %v1469 = vrot.slane %v1461, %v1468
    %v1471 = vunpack.c.l.s4 1966171168
    %v1472 = vunpack.c.0.s8 %v1471
    %v1473 = vlaneseq
    %v1474 = vshrl.u32 %v1473, 7
    %v1475 = vsub.s32 %v1472, %v1474
    %v1476 = vrot.slane %v1462, %v1475
    %v1477 = vcombine.low %v1469, %v1476
    %v1478 = vcombine.low %v1295, %v1296
    %v1479 = vcombine.low %v1297, %v1298
    %v1480 = vcombine.low %v1299, %v1300
    %v1482 = vunpack.c.l.s4 1966171168
    %v1483 = vunpack.c.0.s8 %v1482
    %v1484 = vlaneseq
    %v1485 = vshrl.u32 %v1484, 7
    %v1486 = vsub.s32 %v1483, %v1485
    %v1487 = vrot.slane %v1478, %v1486
    %v1489 = vunpack.c.l.s4 1966171168
    %v1490 = vunpack.c.0.s8 %v1489
    %v1491 = vlaneseq
    %v1492 = vshrl.u32 %v1491, 7
    %v1493 = vsub.s32 %v1490, %v1492
    %v1494 = vrot.slane %v1479, %v1493
    %v1496 = vunpack.c.l.s4 1966171168
    %v1497 = vunpack.c.0.s8 %v1496
    %v1498 = vlaneseq
    %v1499 = vshrl.u32 %v1498, 7
    %v1500 = vsub.s32 %v1497, %v1499
    %v1501 = vrot.slane %v1480, %v1500
    %v1503 = vunpack.c.l.s4 1966171168
    %v1504 = vunpack.c.0.s8 %v1503
    %v1505 = vlaneseq
    %v1506 = vshrl.u32 %v1505, 7
    %v1507 = vsub.s32 %v1504, %v1506
    %v1508 = vrot.slane %v1301, %v1507
    %v1509 = vcombine.low %v1487, %v1494
    %v1510 = vcombine.low %v1501, %v1508
    %v1512 = vunpack.c.l.s4 1966171168
    %v1513 = vunpack.c.0.s8 %v1512
    %v1514 = vlaneseq
    %v1515 = vshrl.u32 %v1514, 7
    %v1516 = vsub.s32 %v1513, %v1515
    %v1517 = vrot.slane %v1509, %v1516
    %v1519 = vunpack.c.l.s4 1966171168
    %v1520 = vunpack.c.0.s8 %v1519
    %v1521 = vlaneseq
    %v1522 = vshrl.u32 %v1521, 7
    %v1523 = vsub.s32 %v1520, %v1522
    %v1524 = vrot.slane %v1510, %v1523
    %v1525 = vcombine.low %v1517, %v1524
    %vm1530 = vcmask 261120
    %1531 = vst.msk [vmem:[#allocation4] sm:$0xff] %vm1530, %v1380
    %vm1532 = vcmask 260096
    %1533 = vst.msk [vmem:[#allocation4 + $0x8] sm:$0x7f] %vm1532, %v1428
    %1534 = vst.msk [vmem:[#allocation4 + $0x10] sm:$0xff] %vm1530, %v1477
    %1535 = vst.msk [vmem:[#allocation4 + $0x18] sm:$0x7f] %vm1532, %v1525
    %v1536 = vld [vmem:[#allocation4] ss:$2 sm:$0x7f]
    %s1537 = scalar_lea.vmem [#allocation4], 16
    %v1538 = vld [vmem:[%s1537] ss:$2 sm:$0x7f]
    %1539 = vst.msk [vmem:[#allocation5] sm:$0x7f] %vm1532, %v1536
    %1540 = vst.msk [vmem:[#allocation5 + $0x8] sm:$0x7f] %vm1532, %v1538
    %s1541 = scalar_lea.vmem [#allocation4], 1
    %v1542 = vld [vmem:[%s1541] ss:$2 sm:$0x7f]
    %s1543 = scalar_lea.vmem [#allocation4], 17
    %v1544 = vld [vmem:[%s1543] ss:$2 sm:$0x7f]
    %1547 = vrot.lane.b32.xlu0 %v1542, 32
    %v1548 = vpop.permute.xlu0 %1547
    %1549 = vrot.lane.b32.xlu0 %v1544, 32
    %v1550 = vpop.permute.xlu0 %1549
    %vm1553 = vcmask 522496
    %1554 = vst.msk [vmem:[#allocation5] sm:$0x7f] %vm1553, %v1548
    %1555 = vst.msk [vmem:[#allocation5 + $0x8] sm:$0x7f] %vm1553, %v1550
    %s1556 = scalar_lea.vmem [#allocation4], 2
    %v1557 = vld [vmem:[%s1556] ss:$2 sm:$0x7f]
    %s1558 = scalar_lea.vmem [#allocation4], 18
    %v1559 = vld [vmem:[%s1558] ss:$2 sm:$0x7f]
    %1562 = vrot.lane.b32.xlu0 %v1557, 64
    %v1563 = vpop.permute.xlu0 %1562
    %1564 = vrot.lane.b32.xlu0 %v1559, 64
    %v1565 = vpop.permute.xlu0 %1564
    %vm1568 = vcmask 784896
    %1569 = vst.msk [vmem:[#allocation5] sm:$0x7f] %vm1568, %v1563
    %1570 = vst.msk [vmem:[#allocation5 + $0x8] sm:$0x7f] %vm1568, %v1565
    %v1571 = vld [vmem:[#allocation5] sm:$0x7f]
    %v1572 = vld [vmem:[#allocation5 + $0x8] sm:$0x7f]
    %v1573 = vld [vmem:[%s5] sm:$0xff]
    %v1574 = vld [vmem:[%s5 + $0x8] sm:$0xff]
    %v1575 = vld [vmem:[%s5 + $0x10] sm:$0xff]
    %v1576 = vld [vmem:[%s5 + $0x18] sm:$0xff]
    %v1577 = vld [vmem:[%s5 + $0x20] sm:$0xff]
    %v1578 = vld [vmem:[%s5 + $0x28] sm:$0xff]
    %v1579 = vld [vmem:[%s5 + $0x30] sm:$0xff]
    %v1580 = vld [vmem:[%s5 + $0x38] sm:$0xff]
    %v1581 = vld [vmem:[%s5 + $0x40] sm:$0xff]
    %v1582 = vld [vmem:[%s5 + $0x48] sm:$0xff]
    %v1583 = vld [vmem:[%s5 + $0x50] sm:$0xff]
    %v1584 = vld [vmem:[%s5 + $0x58] sm:$0xff]
    %v1585 = vld [vmem:[%s6] sm:$0x1]
    %v1587 = vlaneseq
    %v1588 = vshrl.u32 %v1587, 7
    %v1589 = vsub.s32 0, %v1588
    %v1590 = vrot.slane %v1585, %v1589
    %v1593 = vcombine.high %v1571, %v1571
    %v1595 = vunpack.c.l.s4 1966171168
    %v1596 = vunpack.c.0.s8 %v1595
    %v1597 = vlaneseq
    %v1598 = vshrl.u32 %v1597, 7
    %v1599 = vsub.s32 %v1596, %v1598
    %v1600 = vrot.slane %v1571, %v1599
    %v1602 = vunpack.c.l.s4 1966171168
    %v1603 = vunpack.c.0.s8 %v1602
    %v1604 = vlaneseq
    %v1605 = vshrl.u32 %v1604, 7
    %v1606 = vsub.s32 %v1603, %v1605
    %v1607 = vrot.slane %v1593, %v1606
    %v1608 = vcombine.high %v1600, %v1600
    %v1609 = vcombine.high %v1607, %v1607
    %v1611 = vunpack.c.l.s4 1966171168
    %v1612 = vunpack.c.0.s8 %v1611
    %v1613 = vlaneseq
    %v1614 = vshrl.u32 %v1613, 7
    %v1615 = vsub.s32 %v1612, %v1614
    %v1616 = vrot.slane %v1600, %v1615
    %v1618 = vunpack.c.l.s4 1966171168
    %v1619 = vunpack.c.0.s8 %v1618
    %v1620 = vlaneseq
    %v1621 = vshrl.u32 %v1620, 7
    %v1622 = vsub.s32 %v1619, %v1621
    %v1623 = vrot.slane %v1607, %v1622
    %v1625 = vunpack.c.l.s4 1966171168
    %v1626 = vunpack.c.0.s8 %v1625
    %v1627 = vlaneseq
    %v1628 = vshrl.u32 %v1627, 7
    %v1629 = vsub.s32 %v1626, %v1628
    %v1630 = vrot.slane %v1608, %v1629
    %v1632 = vunpack.c.l.s4 1966171168
    %v1633 = vunpack.c.0.s8 %v1632
    %v1634 = vlaneseq
    %v1635 = vshrl.u32 %v1634, 7
    %v1636 = vsub.s32 %v1633, %v1635
    %v1637 = vrot.slane %v1609, %v1636
    %v1638 = vcombine.high %v1616, %v1616
    %v1639 = vcombine.high %v1623, %v1623
    %v1640 = vcombine.high %v1630, %v1630
    %v1641 = vcombine.high %v1572, %v1572
    %v1643 = vunpack.c.l.s4 1966171168
    %v1644 = vunpack.c.0.s8 %v1643
    %v1645 = vlaneseq
    %v1646 = vshrl.u32 %v1645, 7
    %v1647 = vsub.s32 %v1644, %v1646
    %v1648 = vrot.slane %v1572, %v1647
    %v1650 = vunpack.c.l.s4 1966171168
    %v1651 = vunpack.c.0.s8 %v1650
    %v1652 = vlaneseq
    %v1653 = vshrl.u32 %v1652, 7
    %v1654 = vsub.s32 %v1651, %v1653
    %v1655 = vrot.slane %v1641, %v1654
    %v1656 = vcombine.high %v1648, %v1648
    %v1657 = vcombine.high %v1655, %v1655
    %v1659 = vunpack.c.l.s4 1966171168
    %v1660 = vunpack.c.0.s8 %v1659
    %v1661 = vlaneseq
    %v1662 = vshrl.u32 %v1661, 7
    %v1663 = vsub.s32 %v1660, %v1662
    %v1664 = vrot.slane %v1648, %v1663
    %v1666 = vunpack.c.l.s4 1966171168
    %v1667 = vunpack.c.0.s8 %v1666
    %v1668 = vlaneseq
    %v1669 = vshrl.u32 %v1668, 7
    %v1670 = vsub.s32 %v1667, %v1669
    %v1671 = vrot.slane %v1655, %v1670
    %v1673 = vunpack.c.l.s4 1966171168
    %v1674 = vunpack.c.0.s8 %v1673
    %v1675 = vlaneseq
    %v1676 = vshrl.u32 %v1675, 7
    %v1677 = vsub.s32 %v1674, %v1676
    %v1678 = vrot.slane %v1656, %v1677
    %v1680 = vunpack.c.l.s4 1966171168
    %v1681 = vunpack.c.0.s8 %v1680
    %v1682 = vlaneseq
    %v1683 = vshrl.u32 %v1682, 7
    %v1684 = vsub.s32 %v1681, %v1683
    %v1685 = vrot.slane %v1657, %v1684
    %v1686 = vcombine.high %v1664, %v1664
    %v1687 = vcombine.high %v1671, %v1671
    %v1688 = vcombine.high %v1678, %v1678
    %v1689 = vcombine.high %v1590, %v1590
    %v1691 = vunpack.c.l.s4 1966171168
    %v1692 = vunpack.c.0.s8 %v1691
    %v1693 = vlaneseq
    %v1694 = vshrl.u32 %v1693, 7
    %v1695 = vsub.s32 %v1692, %v1694
    %v1696 = vrot.slane %v1590, %v1695
    %v1698 = vunpack.c.l.s4 1966171168
    %v1699 = vunpack.c.0.s8 %v1698
    %v1700 = vlaneseq
    %v1701 = vshrl.u32 %v1700, 7
    %v1702 = vsub.s32 %v1699, %v1701
    %v1703 = vrot.slane %v1689, %v1702
    %v1704 = vcombine.high %v1696, %v1696
    %v1705 = vcombine.high %v1703, %v1703
    %v1707 = vunpack.c.l.s4 1966171168
    %v1708 = vunpack.c.0.s8 %v1707
    %v1709 = vlaneseq
    %v1710 = vshrl.u32 %v1709, 7
    %v1711 = vsub.s32 %v1708, %v1710
    %v1712 = vrot.slane %v1696, %v1711
    %v1714 = vunpack.c.l.s4 1966171168
    %v1715 = vunpack.c.0.s8 %v1714
    %v1716 = vlaneseq
    %v1717 = vshrl.u32 %v1716, 7
    %v1718 = vsub.s32 %v1715, %v1717
    %v1719 = vrot.slane %v1703, %v1718
    %v1721 = vunpack.c.l.s4 1966171168
    %v1722 = vunpack.c.0.s8 %v1721
    %v1723 = vlaneseq
    %v1724 = vshrl.u32 %v1723, 7
    %v1725 = vsub.s32 %v1722, %v1724
    %v1726 = vrot.slane %v1704, %v1725
    %v1728 = vunpack.c.l.s4 1966171168
    %v1729 = vunpack.c.0.s8 %v1728
    %v1730 = vlaneseq
    %v1731 = vshrl.u32 %v1730, 7
    %v1732 = vsub.s32 %v1729, %v1731
    %v1733 = vrot.slane %v1705, %v1732
    %v1734 = vcombine.high %v1712, %v1712
    %v1735 = vcombine.high %v1719, %v1719
    %v1736 = vcombine.high %v1726, %v1726
    %v1737 = vcombine.low %v1616, %v1630
    %v1738 = vcombine.low %v1638, %v1640
    %v1739 = vcombine.low %v1623, %v1637
    %v1740 = vcombine.low %v1639, %v1664
    %v1742 = vunpack.c.l.s4 1966171168
    %v1743 = vunpack.c.0.s8 %v1742
    %v1744 = vlaneseq
    %v1745 = vshrl.u32 %v1744, 7
    %v1746 = vsub.s32 %v1743, %v1745
    %v1747 = vrot.slane %v1737, %v1746
    %v1749 = vunpack.c.l.s4 1966171168
    %v1750 = vunpack.c.0.s8 %v1749
    %v1751 = vlaneseq
    %v1752 = vshrl.u32 %v1751, 7
    %v1753 = vsub.s32 %v1750, %v1752
    %v1754 = vrot.slane %v1738, %v1753
    %v1756 = vunpack.c.l.s4 1966171168
    %v1757 = vunpack.c.0.s8 %v1756
    %v1758 = vlaneseq
    %v1759 = vshrl.u32 %v1758, 7
    %v1760 = vsub.s32 %v1757, %v1759
    %v1761 = vrot.slane %v1739, %v1760
    %v1763 = vunpack.c.l.s4 1966171168
    %v1764 = vunpack.c.0.s8 %v1763
    %v1765 = vlaneseq
    %v1766 = vshrl.u32 %v1765, 7
    %v1767 = vsub.s32 %v1764, %v1766
    %v1768 = vrot.slane %v1740, %v1767
    %v1769 = vcombine.low %v1747, %v1754
    %v1770 = vcombine.low %v1761, %v1768
    %v1772 = vunpack.c.l.s4 1966171168
    %v1773 = vunpack.c.0.s8 %v1772
    %v1774 = vlaneseq
    %v1775 = vshrl.u32 %v1774, 7
    %v1776 = vsub.s32 %v1773, %v1775
    %v1777 = vrot.slane %v1769, %v1776
    %v1779 = vunpack.c.l.s4 1966171168
    %v1780 = vunpack.c.0.s8 %v1779
    %v1781 = vlaneseq
    %v1782 = vshrl.u32 %v1781, 7
    %v1783 = vsub.s32 %v1780, %v1782
    %v1784 = vrot.slane %v1770, %v1783
    %v1785 = vcombine.low %v1777, %v1784
    %v1786 = vcombine.low %v1678, %v1686
    %v1787 = vcombine.low %v1688, %v1671
    %v1788 = vcombine.low %v1685, %v1687
    %v1790 = vunpack.c.l.s4 1966171168
    %v1791 = vunpack.c.0.s8 %v1790
    %v1792 = vlaneseq
    %v1793 = vshrl.u32 %v1792, 7
    %v1794 = vsub.s32 %v1791, %v1793
    %v1795 = vrot.slane %v1786, %v1794
    %v1797 = vunpack.c.l.s4 1966171168
    %v1798 = vunpack.c.0.s8 %v1797
    %v1799 = vlaneseq
    %v1800 = vshrl.u32 %v1799, 7
    %v1801 = vsub.s32 %v1798, %v1800
    %v1802 = vrot.slane %v1787, %v1801
    %v1804 = vunpack.c.l.s4 1966171168
    %v1805 = vunpack.c.0.s8 %v1804
    %v1806 = vlaneseq
    %v1807 = vshrl.u32 %v1806, 7
    %v1808 = vsub.s32 %v1805, %v1807
    %v1809 = vrot.slane %v1788, %v1808
    %v1810 = vcombine.low %v1795, %v1802
    %v1812 = vunpack.c.l.s4 1966171168
    %v1813 = vunpack.c.0.s8 %v1812
    %v1814 = vlaneseq
    %v1815 = vshrl.u32 %v1814, 7
    %v1816 = vsub.s32 %v1813, %v1815
    %v1817 = vrot.slane %v1810, %v1816
    %v1819 = vunpack.c.l.s4 1966171168
    %v1820 = vunpack.c.0.s8 %v1819
    %v1821 = vlaneseq
    %v1822 = vshrl.u32 %v1821, 7
    %v1823 = vsub.s32 %v1820, %v1822
    %v1824 = vrot.slane %v1809, %v1823
    %v1825 = vcombine.low %v1817, %v1824
    %v1826 = vcombine.low %v1712, %v1726
    %v1827 = vcombine.low %v1734, %v1736
    %v1828 = vcombine.low %v1719, %v1733
    %v1829 = vcombine.low %v1735, %v1712
    %v1831 = vunpack.c.l.s4 1966171168
    %v1832 = vunpack.c.0.s8 %v1831
    %v1833 = vlaneseq
    %v1834 = vshrl.u32 %v1833, 7
    %v1835 = vsub.s32 %v1832, %v1834
    %v1836 = vrot.slane %v1826, %v1835
    %v1838 = vunpack.c.l.s4 1966171168
    %v1839 = vunpack.c.0.s8 %v1838
    %v1840 = vlaneseq
    %v1841 = vshrl.u32 %v1840, 7
    %v1842 = vsub.s32 %v1839, %v1841
    %v1843 = vrot.slane %v1827, %v1842
    %v1845 = vunpack.c.l.s4 1966171168
    %v1846 = vunpack.c.0.s8 %v1845
    %v1847 = vlaneseq
    %v1848 = vshrl.u32 %v1847, 7
    %v1849 = vsub.s32 %v1846, %v1848
    %v1850 = vrot.slane %v1828, %v1849
    %v1852 = vunpack.c.l.s4 1966171168
    %v1853 = vunpack.c.0.s8 %v1852
    %v1854 = vlaneseq
    %v1855 = vshrl.u32 %v1854, 7
    %v1856 = vsub.s32 %v1853, %v1855
    %v1857 = vrot.slane %v1829, %v1856
    %v1858 = vcombine.low %v1836, %v1843
    %v1859 = vcombine.low %v1850, %v1857
    %v1861 = vunpack.c.l.s4 1966171168
    %v1862 = vunpack.c.0.s8 %v1861
    %v1863 = vlaneseq
    %v1864 = vshrl.u32 %v1863, 7
    %v1865 = vsub.s32 %v1862, %v1864
    %v1866 = vrot.slane %v1858, %v1865
    %v1868 = vunpack.c.l.s4 1966171168
    %v1869 = vunpack.c.0.s8 %v1868
    %v1870 = vlaneseq
    %v1871 = vshrl.u32 %v1870, 7
    %v1872 = vsub.s32 %v1869, %v1871
    %v1873 = vrot.slane %v1859, %v1872
    %v1874 = vcombine.low %v1866, %v1873
    %v1875 = vcombine.low %v1726, %v1734
    %v1876 = vcombine.low %v1736, %v1719
    %v1877 = vcombine.low %v1733, %v1735
    %v1879 = vunpack.c.l.s4 1966171168
    %v1880 = vunpack.c.0.s8 %v1879
    %v1881 = vlaneseq
    %v1882 = vshrl.u32 %v1881, 7
    %v1883 = vsub.s32 %v1880, %v1882
    %v1884 = vrot.slane %v1875, %v1883
    %v1886 = vunpack.c.l.s4 1966171168
    %v1887 = vunpack.c.0.s8 %v1886
    %v1888 = vlaneseq
    %v1889 = vshrl.u32 %v1888, 7
    %v1890 = vsub.s32 %v1887, %v1889
    %v1891 = vrot.slane %v1876, %v1890
    %v1893 = vunpack.c.l.s4 1966171168
    %v1894 = vunpack.c.0.s8 %v1893
    %v1895 = vlaneseq
    %v1896 = vshrl.u32 %v1895, 7
    %v1897 = vsub.s32 %v1894, %v1896
    %v1898 = vrot.slane %v1877, %v1897
    %v1899 = vcombine.low %v1884, %v1891
    %v1901 = vunpack.c.l.s4 1966171168
    %v1902 = vunpack.c.0.s8 %v1901
    %v1903 = vlaneseq
    %v1904 = vshrl.u32 %v1903, 7
    %v1905 = vsub.s32 %v1902, %v1904
    %v1906 = vrot.slane %v1899, %v1905
    %v1908 = vunpack.c.l.s4 1966171168
    %v1909 = vunpack.c.0.s8 %v1908
    %v1910 = vlaneseq
    %v1911 = vshrl.u32 %v1910, 7
    %v1912 = vsub.s32 %v1909, %v1911
    %v1913 = vrot.slane %v1898, %v1912
    %v1914 = vcombine.low %v1906, %v1913
    %vm1917 = vcmask 785408
    %v1918 = vsel %vm1917, %v1785, 0
    %v1920 = vsel %vm1917, %v1825, 0
    %1922 = vmatprep.subr.mxu0 0.0
    %1923 = vmatpush1.msra.mxu0 %v1573
    %1924 = vmatprep.subr.mxu0 0.0
    %1925 = vmatpush1.msra.mxu0 %v1574
    %1926 = vmatprep.subr.mxu0 0.0
    %1927 = vmatpush1.msra.mxu0 %v1575
    %1928 = vmatprep.subr.mxu0 0.0
    %1929 = vmatpush1.msra.mxu0 %v1576
    %1930 = vmatprep.subr.mxu0 0.0
    %1931 = vmatpush1.msra.mxu0 %v1577
    %1932 = vmatprep.subr.mxu0 0.0
    %1933 = vmatpush1.msra.mxu0 %v1578
    %1934 = vmatprep.subr.mxu0 0.0
    %1935 = vmatpush1.msra.mxu0 %v1579
    %1936 = vmatprep.subr.mxu0 0.0
    %1937 = vmatpush1.msra.mxu0 %v1580
    %1938 = vmatprep.subr.mxu0 0.0
    %1939 = vmatpush1.msra.mxu0 %v1581
    %1940 = vmatprep.subr.mxu0 0.0
    %1941 = vmatpush1.msra.mxu0 %v1582
    %1942 = vmatprep.subr.mxu0 0.0
    %1943 = vmatpush1.msra.mxu0 %v1583
    %1944 = vmatprep.subr.mxu0 0.0
    %1945 = vmatpush1.msra.mxu0 %v1584
    %1946 = vmatprep.subr.mxu0 0.0
    %1947 = vmatpush1.msra.mxu0 0.0
    %1948 = vmatprep.subr.mxu0 0.0
    %1949 = vmatpush1.msra.mxu0 0.0
    %1950 = vmatprep.subr.mxu0 0.0
    %1951 = vmatpush1.msra.mxu0 0.0
    %1952 = vmatprep.subr.mxu0 0.0
    %1953 = vmatpush1.msra.mxu0 0.0
    %1954 = vmatprep.subr.mxu0 0.0
    %1955 = vmatpush1.msra.mxu0 0.0
    %1956 = vmatprep.subr.mxu0 0.0
    %1957 = vmatpush1.msra.mxu0 0.0
    %1958 = vmatprep.subr.mxu0 0.0
    %1959 = vmatpush1.msra.mxu0 0.0
    %1960 = vmatprep.subr.mxu0 0.0
    %1961 = vmatpush1.msra.mxu0 0.0
    %1962 = vmatprep.subr.mxu0 0.0
    %1963 = vmatpush1.msra.mxu0 0.0
    %1964 = vmatprep.subr.mxu0 0.0
    %1965 = vmatpush1.msra.mxu0 0.0
    %1966 = vmatprep.subr.mxu0 0.0
    %1967 = vmatpush1.msra.mxu0 0.0
    %1968 = vmatprep.subr.mxu0 0.0
    %1969 = vmatpush1.msra.mxu0 0.0
    %1970 = vmatprep.subr.mxu0 0.0
    %1971 = vmatpush1.msra.mxu0 0.0
    %1972 = vmatprep.subr.mxu0 0.0
    %1973 = vmatpush1.msra.mxu0 0.0
    %1974 = vmatprep.subr.mxu0 0.0
    %1975 = vmatpush1.msra.mxu0 0.0
    %1976 = vmatprep.subr.mxu0 0.0
    %1977 = vmatpush1.msra.mxu0 0.0
    %1978 = vmatprep.subr.mxu0 0.0
    %1979 = vmatpush1.msra.mxu0 0.0
    %1980 = vmatprep.subr.mxu0 0.0
    %1981 = vmatpush1.msra.mxu0 0.0
    %1982 = vmatprep.subr.mxu0 0.0
    %1983 = vmatpush1.msra.mxu0 0.0
    %1984 = vmatprep.subr.mxu0 0.0
    %1985 = vmatpush1.msra.mxu0 0.0
    %1986 = vmatprep.mubr.f32.mxu0 0.0
    %1987 = vmatmul.mubr.f32.gmra.mrb[0].mxu0 %v1918
    %v1988 = vpop.f32.mrb[0].mxu0
    %v1989 = vadd.f32 %v1874, %v1988
    %v1990 = vpop.f32.mrb[0].mxu0
    %1991 = vmatprep.mubr.f32.mxu0 0.0
    %1992 = vmatmul.mubr.f32.gmra.mrb[0].mxu0 %v1920
    %v1993 = vpop.f32.mrb[0].mxu0
    %v1994 = vadd.f32 %v1914, %v1993
    %v1995 = vpop.f32.mrb[0].mxu0
    %1996 = vdwg.mxu0
    %v1999 = vcombine.high %v1989, %v1989
    %v2001 = vunpack.c.l.s4 1966171168
    %v2002 = vunpack.c.0.s8 %v2001
    %v2003 = vlaneseq
    %v2004 = vshrl.u32 %v2003, 7
    %v2005 = vsub.s32 %v2002, %v2004
    %v2006 = vrot.slane %v1989, %v2005
    %v2008 = vunpack.c.l.s4 1966171168
    %v2009 = vunpack.c.0.s8 %v2008
    %v2010 = vlaneseq
    %v2011 = vshrl.u32 %v2010, 7
    %v2012 = vsub.s32 %v2009, %v2011
    %v2013 = vrot.slane %v1999, %v2012
    %v2014 = vcombine.high %v2006, %v2006
    %v2015 = vcombine.high %v2013, %v2013
    %v2017 = vunpack.c.l.s4 1966171168
    %v2018 = vunpack.c.0.s8 %v2017
    %v2019 = vlaneseq
    %v2020 = vshrl.u32 %v2019, 7
    %v2021 = vsub.s32 %v2018, %v2020
    %v2022 = vrot.slane %v2006, %v2021
    %v2024 = vunpack.c.l.s4 1966171168
    %v2025 = vunpack.c.0.s8 %v2024
    %v2026 = vlaneseq
    %v2027 = vshrl.u32 %v2026, 7
    %v2028 = vsub.s32 %v2025, %v2027
    %v2029 = vrot.slane %v2013, %v2028
    %v2031 = vunpack.c.l.s4 1966171168
    %v2032 = vunpack.c.0.s8 %v2031
    %v2033 = vlaneseq
    %v2034 = vshrl.u32 %v2033, 7
    %v2035 = vsub.s32 %v2032, %v2034
    %v2036 = vrot.slane %v2014, %v2035
    %v2038 = vunpack.c.l.s4 1966171168
    %v2039 = vunpack.c.0.s8 %v2038
    %v2040 = vlaneseq
    %v2041 = vshrl.u32 %v2040, 7
    %v2042 = vsub.s32 %v2039, %v2041
    %v2043 = vrot.slane %v2015, %v2042
    %v2044 = vcombine.high %v2022, %v2022
    %v2045 = vcombine.high %v2029, %v2029
    %v2046 = vcombine.high %v2036, %v2036
    %v2047 = vcombine.high %v2043, %v2043
    %v2048 = vcombine.high %v1994, %v1994
    %v2050 = vunpack.c.l.s4 1966171168
    %v2051 = vunpack.c.0.s8 %v2050
    %v2052 = vlaneseq
    %v2053 = vshrl.u32 %v2052, 7
    %v2054 = vsub.s32 %v2051, %v2053
    %v2055 = vrot.slane %v1994, %v2054
    %v2057 = vunpack.c.l.s4 1966171168
    %v2058 = vunpack.c.0.s8 %v2057
    %v2059 = vlaneseq
    %v2060 = vshrl.u32 %v2059, 7
    %v2061 = vsub.s32 %v2058, %v2060
    %v2062 = vrot.slane %v2048, %v2061
    %v2063 = vcombine.high %v2055, %v2055
    %v2064 = vcombine.high %v2062, %v2062
    %v2066 = vunpack.c.l.s4 1966171168
    %v2067 = vunpack.c.0.s8 %v2066
    %v2068 = vlaneseq
    %v2069 = vshrl.u32 %v2068, 7
    %v2070 = vsub.s32 %v2067, %v2069
    %v2071 = vrot.slane %v2055, %v2070
    %v2073 = vunpack.c.l.s4 1966171168
    %v2074 = vunpack.c.0.s8 %v2073
    %v2075 = vlaneseq
    %v2076 = vshrl.u32 %v2075, 7
    %v2077 = vsub.s32 %v2074, %v2076
    %v2078 = vrot.slane %v2062, %v2077
    %v2080 = vunpack.c.l.s4 1966171168
    %v2081 = vunpack.c.0.s8 %v2080
    %v2082 = vlaneseq
    %v2083 = vshrl.u32 %v2082, 7
    %v2084 = vsub.s32 %v2081, %v2083
    %v2085 = vrot.slane %v2063, %v2084
    %v2087 = vunpack.c.l.s4 1966171168
    %v2088 = vunpack.c.0.s8 %v2087
    %v2089 = vlaneseq
    %v2090 = vshrl.u32 %v2089, 7
    %v2091 = vsub.s32 %v2088, %v2090
    %v2092 = vrot.slane %v2064, %v2091
    %v2093 = vcombine.high %v2071, %v2071
    %v2094 = vcombine.high %v2085, %v2085
    %v2109 = vmax.f32 %v2022, 0.0
    %v2110 = vmax.f32 %v2036, 0.0
    %v2111 = vmax.f32 %v2044, 0.0
    %v2112 = vmax.f32 %v2046, 0.0
    %v2113 = vmax.f32 %v2029, 0.0
    %v2114 = vmax.f32 %v2043, 0.0
    %v2115 = vmax.f32 %v2045, 0.0
    %v2116 = vmax.f32 %v2047, 0.0
    %v2117 = vmax.f32 %v2071, 0.0
    %v2118 = vmax.f32 %v2085, 0.0
    %v2119 = vmax.f32 %v2093, 0.0
    %v2120 = vmax.f32 %v2094, 0.0
    %v2121 = vmax.f32 %v2078, 0.0
    %v2122 = vmax.f32 %v2092, 0.0
    %v2125 = vcombine.low %v2109, %v2116
    %v2127 = vunpack.c.l.s4 1935823168
    %v2128 = vunpack.c.0.s8 %v2127
    %v2129 = vlaneseq
    %v2130 = vshrl.u32 %v2129, 7
    %v2131 = vsub.s32 %v2128, %v2130
    %v2132 = vrot.slane %v2125, %v2131
    %vm2134 = vcmask 517120
    %2135 = vst.msk [vmem:[#allocation6] sm:$0x3] %vm2134, %v2132
    %v2138 = vcombine.low %v2110, %v2117
    %v2140 = vunpack.c.l.s4 1935823168
    %v2141 = vunpack.c.0.s8 %v2140
    %v2142 = vlaneseq
    %v2143 = vshrl.u32 %v2142, 7
    %v2144 = vsub.s32 %v2141, %v2143
    %v2145 = vrot.slane %v2138, %v2144
    %2146 = vrot.lane.b32.xlu0 %v2145, 64
    %v2147 = vpop.permute.xlu0 %2146
    %vm2149 = vcmask 1041920
    %2150 = vst.msk [vmem:[#allocation6] sm:$0x3] %vm2149, %v2147
    %v2153 = vcombine.low %v2111, %v2118
    %v2155 = vunpack.c.l.s4 1935823168
    %v2156 = vunpack.c.0.s8 %v2155
    %v2157 = vlaneseq
    %v2158 = vshrl.u32 %v2157, 7
    %v2159 = vsub.s32 %v2156, %v2158
    %v2160 = vrot.slane %v2153, %v2159
    %2162 = vst.msk [vmem:[#allocation6 + $0x2] sm:$0x3] %vm2134, %v2160
    %v2165 = vcombine.low %v2112, %v2119
    %v2167 = vunpack.c.l.s4 1935823168
    %v2168 = vunpack.c.0.s8 %v2167
    %v2169 = vlaneseq
    %v2170 = vshrl.u32 %v2169, 7
    %v2171 = vsub.s32 %v2168, %v2170
    %v2172 = vrot.slane %v2165, %v2171
    %2173 = vrot.lane.b32.xlu0 %v2172, 64
    %v2174 = vpop.permute.xlu0 %2173
    %2176 = vst.msk [vmem:[#allocation6 + $0x2] sm:$0x3] %vm2149, %v2174
    %v2179 = vcombine.low %v2113, %v2120
    %v2181 = vunpack.c.l.s4 1935823168
    %v2182 = vunpack.c.0.s8 %v2181
    %v2183 = vlaneseq
    %v2184 = vshrl.u32 %v2183, 7
    %v2185 = vsub.s32 %v2182, %v2184
    %v2186 = vrot.slane %v2179, %v2185
    %2188 = vst.msk [vmem:[#allocation6 + $0x4] sm:$0x3] %vm2134, %v2186
    %v2191 = vcombine.low %v2114, %v2121
    %v2193 = vunpack.c.l.s4 1935823168
    %v2194 = vunpack.c.0.s8 %v2193
    %v2195 = vlaneseq
    %v2196 = vshrl.u32 %v2195, 7
    %v2197 = vsub.s32 %v2194, %v2196
    %v2198 = vrot.slane %v2191, %v2197
    %2199 = vrot.lane.b32.xlu0 %v2198, 64
    %v2200 = vpop.permute.xlu0 %2199
    %2202 = vst.msk [vmem:[#allocation6 + $0x4] sm:$0x3] %vm2149, %v2200
    %v2205 = vcombine.low %v2115, %v2122
    %v2207 = vunpack.c.l.s4 1935823168
    %v2208 = vunpack.c.0.s8 %v2207
    %v2209 = vlaneseq
    %v2210 = vshrl.u32 %v2209, 7
    %v2211 = vsub.s32 %v2208, %v2210
    %v2212 = vrot.slane %v2205, %v2211
    %2214 = vst.msk [vmem:[#allocation6 + $0x6] sm:$0x3] %vm2134, %v2212
    %v2215 = vld [vmem:[#allocation6] sm:$0xff]
    %v2216 = vld [vmem:[%s7] sm:$0xff]
    %v2217 = vld [vmem:[%s7 + $0x8] sm:$0xff]
    %v2218 = vld [vmem:[%s7 + $0x10] sm:$0xff]
    %v2219 = vld [vmem:[%s7 + $0x18] sm:$0xff]
    %v2220 = vld [vmem:[%s7 + $0x20] sm:$0xff]
    %v2221 = vld [vmem:[%s7 + $0x28] sm:$0xff]
    %v2222 = vld [vmem:[%s7 + $0x30] sm:$0xff]
    %v2223 = vld [vmem:[%s7 + $0x38] sm:$0xff]
    %v2224 = vld [vmem:[%s7 + $0x40] sm:$0xff]
    %v2225 = vld [vmem:[%s7 + $0x48] sm:$0xff]
    %v2226 = vld [vmem:[%s7 + $0x50] sm:$0xff]
    %v2227 = vld [vmem:[%s7 + $0x58] sm:$0xff]
    %v2228 = vld [vmem:[%s7 + $0x60] sm:$0xff]
    %v2229 = vld [vmem:[%s7 + $0x68] sm:$0xff]
    %v2230 = vld [vmem:[%s7 + $0x70] sm:$0xff]
    %v2231 = vld [vmem:[%s7 + $0x78] sm:$0xff]
    %v2232 = vld [vmem:[%s7 + $0x80] sm:$0xff]
    %v2233 = vld [vmem:[%s7 + $0x88] sm:$0xff]
    %v2234 = vld [vmem:[%s7 + $0x90] sm:$0xff]
    %v2235 = vld [vmem:[%s7 + $0x98] sm:$0xff]
    %v2236 = vld [vmem:[%s7 + $0xa0] sm:$0xff]
    %v2237 = vld [vmem:[%s7 + $0xa8] sm:$0xff]
    %v2238 = vld [vmem:[%s7 + $0xb0] sm:$0xff]
    %v2239 = vld [vmem:[%s7 + $0xb8] sm:$0xff]
    %v2240 = vld [vmem:[%s7 + $0xc0] sm:$0xff]
    %v2241 = vld [vmem:[%s7 + $0xc8] sm:$0xff]
    %v2242 = vld [vmem:[%s7 + $0xd0] sm:$0xff]
    %v2243 = vld [vmem:[%s7 + $0xd8] sm:$0xff]
    %v2244 = vld [vmem:[%s7 + $0xe0] sm:$0xff]
    %v2245 = vld [vmem:[%s7 + $0xe8] sm:$0xff]
    %v2246 = vld [vmem:[%s7 + $0xf0] sm:$0xff]
    %v2247 = vld [vmem:[%s7 + $0xf8] sm:$0xff]
    %v2248 = vld [vmem:[%s7 + $0x100] sm:$0xff]
    %v2249 = vld [vmem:[%s7 + $0x108] sm:$0xff]
    %v2250 = vld [vmem:[%s7 + $0x110] sm:$0xff]
    %v2251 = vld [vmem:[%s7 + $0x118] sm:$0xff]
    %v2252 = vld [vmem:[%s7 + $0x120] sm:$0xff]
    %v2253 = vld [vmem:[%s7 + $0x128] sm:$0xff]
    %v2254 = vld [vmem:[%s7 + $0x130] sm:$0xff]
    %v2255 = vld [vmem:[%s7 + $0x138] sm:$0xff]
    %v2256 = vld [vmem:[%s7 + $0x140] sm:$0xff]
    %v2257 = vld [vmem:[%s7 + $0x148] sm:$0xff]
    %v2258 = vld [vmem:[%s7 + $0x150] sm:$0xff]
    %v2259 = vld [vmem:[%s7 + $0x158] sm:$0xff]
    %v2260 = vld [vmem:[%s7 + $0x160] sm:$0xff]
    %v2261 = vld [vmem:[%s7 + $0x168] sm:$0xff]
    %v2262 = vld [vmem:[%s7 + $0x170] sm:$0xff]
    %v2263 = vld [vmem:[%s7 + $0x178] sm:$0xff]
    %v2264 = vld [vmem:[%s7 + $0x180] sm:$0xff]
    %v2265 = vld [vmem:[%s7 + $0x188] sm:$0xff]
    %v2266 = vld [vmem:[%s7 + $0x190] sm:$0xff]
    %v2267 = vld [vmem:[%s7 + $0x198] sm:$0xff]
    %v2268 = vld [vmem:[%s7 + $0x1a0] sm:$0xff]
    %v2269 = vld [vmem:[%s7 + $0x1a8] sm:$0xff]
    %v2270 = vld [vmem:[%s7 + $0x1b0] sm:$0xff]
    %v2271 = vld [vmem:[%s7 + $0x1b8] sm:$0xff]
    %v2272 = vld [vmem:[%s8] sm:$0x1]
    %v2274 = vlaneseq
    %v2275 = vshrl.u32 %v2274, 7
    %v2276 = vsub.s32 0, %v2275
    %v2277 = vrot.slane %v2272, %v2276
    %v2280 = vcombine.high %v2215, %v2215
    %v2282 = vunpack.c.l.s4 1983009808
    %v2283 = vunpack.c.0.s8 %v2282
    %v2284 = vlaneseq
    %v2285 = vshrl.u32 %v2284, 7
    %v2286 = vsub.s32 %v2283, %v2285
    %v2287 = vrot.slane %v2215, %v2286
    %v2289 = vunpack.c.l.s4 1983009808
    %v2290 = vunpack.c.0.s8 %v2289
    %v2291 = vlaneseq
    %v2292 = vshrl.u32 %v2291, 7
    %v2293 = vsub.s32 %v2290, %v2292
    %v2294 = vrot.slane %v2280, %v2293
    %v2295 = vcombine.high %v2287, %v2287
    %v2296 = vcombine.high %v2294, %v2294
    %vm2300 = vcmask 523264
    %v2301 = vsel %vm2300, %v2296, 0
    %2303 = vmatprep.subr.mxu0 0.0
    %2304 = vmatpush1.msra.mxu0 %v2216
    %2305 = vmatprep.subr.mxu0 0.0
    %2306 = vmatpush1.msra.mxu0 %v2217
    %2307 = vmatprep.subr.mxu0 0.0
    %2308 = vmatpush1.msra.mxu0 %v2218
    %2309 = vmatprep.subr.mxu0 0.0
    %2310 = vmatpush1.msra.mxu0 %v2219
    %2311 = vmatprep.subr.mxu0 0.0
    %2312 = vmatpush1.msra.mxu0 %v2220
    %2313 = vmatprep.subr.mxu0 0.0
    %2314 = vmatpush1.msra.mxu0 %v2221
    %2315 = vmatprep.subr.mxu0 0.0
    %2316 = vmatpush1.msra.mxu0 %v2222
    %2317 = vmatprep.subr.mxu0 0.0
    %2318 = vmatpush1.msra.mxu0 %v2223
    %2319 = vmatprep.subr.mxu0 0.0
    %2320 = vmatpush1.msra.mxu0 %v2224
    %2321 = vmatprep.subr.mxu0 0.0
    %2322 = vmatpush1.msra.mxu0 %v2225
    %2323 = vmatprep.subr.mxu0 0.0
    %2324 = vmatpush1.msra.mxu0 %v2226
    %2325 = vmatprep.subr.mxu0 0.0
    %2326 = vmatpush1.msra.mxu0 %v2227
    %2327 = vmatprep.subr.mxu0 0.0
    %2328 = vmatpush1.msra.mxu0 %v2228
    %2329 = vmatprep.subr.mxu0 0.0
    %2330 = vmatpush1.msra.mxu0 %v2229
    %2331 = vmatprep.subr.mxu0 0.0
    %2332 = vmatpush1.msra.mxu0 %v2230
    %2333 = vmatprep.subr.mxu0 0.0
    %2334 = vmatpush1.msra.mxu0 %v2231
    %2335 = vmatprep.subr.mxu0 0.0
    %2336 = vmatpush1.msra.mxu0 %v2232
    %2337 = vmatprep.subr.mxu0 0.0
    %2338 = vmatpush1.msra.mxu0 %v2233
    %2339 = vmatprep.subr.mxu0 0.0
    %2340 = vmatpush1.msra.mxu0 %v2234
    %2341 = vmatprep.subr.mxu0 0.0
    %2342 = vmatpush1.msra.mxu0 %v2235
    %2343 = vmatprep.subr.mxu0 0.0
    %2344 = vmatpush1.msra.mxu0 %v2236
    %2345 = vmatprep.subr.mxu0 0.0
    %2346 = vmatpush1.msra.mxu0 %v2237
    %2347 = vmatprep.subr.mxu0 0.0
    %2348 = vmatpush1.msra.mxu0 %v2238
    %2349 = vmatprep.subr.mxu0 0.0
    %2350 = vmatpush1.msra.mxu0 %v2239
    %2351 = vmatprep.subr.mxu0 0.0
    %2352 = vmatpush1.msra.mxu0 %v2240
    %2353 = vmatprep.subr.mxu0 0.0
    %2354 = vmatpush1.msra.mxu0 %v2241
    %2355 = vmatprep.subr.mxu0 0.0
    %2356 = vmatpush1.msra.mxu0 %v2242
    %2357 = vmatprep.subr.mxu0 0.0
    %2358 = vmatpush1.msra.mxu0 %v2243
    %2359 = vmatprep.subr.mxu0 0.0
    %2360 = vmatpush1.msra.mxu0 %v2244
    %2361 = vmatprep.subr.mxu0 0.0
    %2362 = vmatpush1.msra.mxu0 %v2245
    %2363 = vmatprep.subr.mxu0 0.0
    %2364 = vmatpush1.msra.mxu0 %v2246
    %2365 = vmatprep.subr.mxu0 0.0
    %2366 = vmatpush1.msra.mxu0 %v2247
    %2367 = vmatprep.mubr.f32.mxu0 %v2295
    %2368 = vmatmul.mubr.f32.gmra.mrb[0].mxu0 %v2287
    %v2369 = vpop.f32.mrb[0].mxu0
    %v2370 = vadd.f32 %v2277, %v2369
    %v2371 = vpop.f32.mrb[0].mxu0
    %2372 = vdwg.mxu0
    %2373 = vmatprep.subr.mxu0 0.0
    %2374 = vmatpush1.msra.mxu0 %v2248
    %2375 = vmatprep.subr.mxu0 0.0
    %2376 = vmatpush1.msra.mxu0 %v2249
    %2377 = vmatprep.subr.mxu0 0.0
    %2378 = vmatpush1.msra.mxu0 %v2250
    %2379 = vmatprep.subr.mxu0 0.0
    %2380 = vmatpush1.msra.mxu0 %v2251
    %2381 = vmatprep.subr.mxu0 0.0
    %2382 = vmatpush1.msra.mxu0 %v2252
    %2383 = vmatprep.subr.mxu0 0.0
    %2384 = vmatpush1.msra.mxu0 %v2253
    %2385 = vmatprep.subr.mxu0 0.0
    %2386 = vmatpush1.msra.mxu0 %v2254
    %2387 = vmatprep.subr.mxu0 0.0
    %2388 = vmatpush1.msra.mxu0 %v2255
    %2389 = vmatprep.subr.mxu0 0.0
    %2390 = vmatpush1.msra.mxu0 %v2256
    %2391 = vmatprep.subr.mxu0 0.0
    %2392 = vmatpush1.msra.mxu0 %v2257
    %2393 = vmatprep.subr.mxu0 0.0
    %2394 = vmatpush1.msra.mxu0 %v2258
    %2395 = vmatprep.subr.mxu0 0.0
    %2396 = vmatpush1.msra.mxu0 %v2259
    %2397 = vmatprep.subr.mxu0 0.0
    %2398 = vmatpush1.msra.mxu0 %v2260
    %2399 = vmatprep.subr.mxu0 0.0
    %2400 = vmatpush1.msra.mxu0 %v2261
    %2401 = vmatprep.subr.mxu0 0.0
    %2402 = vmatpush1.msra.mxu0 %v2262
    %2403 = vmatprep.subr.mxu0 0.0
    %2404 = vmatpush1.msra.mxu0 %v2263
    %2405 = vmatprep.subr.mxu0 0.0
    %2406 = vmatpush1.msra.mxu0 %v2264
    %2407 = vmatprep.subr.mxu0 0.0
    %2408 = vmatpush1.msra.mxu0 %v2265
    %2409 = vmatprep.subr.mxu0 0.0
    %2410 = vmatpush1.msra.mxu0 %v2266
    %2411 = vmatprep.subr.mxu0 0.0
    %2412 = vmatpush1.msra.mxu0 %v2267
    %2413 = vmatprep.subr.mxu0 0.0
    %2414 = vmatpush1.msra.mxu0 %v2268
    %2415 = vmatprep.subr.mxu0 0.0
    %2416 = vmatpush1.msra.mxu0 %v2269
    %2417 = vmatprep.subr.mxu0 0.0
    %2418 = vmatpush1.msra.mxu0 %v2270
    %2419 = vmatprep.subr.mxu0 0.0
    %2420 = vmatpush1.msra.mxu0 %v2271
    %2421 = vmatprep.subr.mxu0 0.0
    %2422 = vmatpush1.msra.mxu0 0.0
    %2423 = vmatprep.subr.mxu0 0.0
    %2424 = vmatpush1.msra.mxu0 0.0
    %2425 = vmatprep.subr.mxu0 0.0
    %2426 = vmatpush1.msra.mxu0 0.0
    %2427 = vmatprep.subr.mxu0 0.0
    %2428 = vmatpush1.msra.mxu0 0.0
    %2429 = vmatprep.subr.mxu0 0.0
    %2430 = vmatpush1.msra.mxu0 0.0
    %2431 = vmatprep.subr.mxu0 0.0
    %2432 = vmatpush1.msra.mxu0 0.0
    %2433 = vmatprep.subr.mxu0 0.0
    %2434 = vmatpush1.msra.mxu0 0.0
    %2435 = vmatprep.subr.mxu0 0.0
    %2436 = vmatpush1.msra.mxu0 0.0
    %2437 = vmatprep.mubr.f32.mxu0 %v2301
    %2438 = vmatmul.mubr.f32.gmra.mrb[0].mxu0 %v2294
    %v2439 = vpop.f32.mrb[0].mxu0
    %v2440 = vadd.f32 %v2370, %v2439
    %v2441 = vpop.f32.mrb[0].mxu0
    %2442 = vdwg.mxu0
    %v2443 = vsub.f32 0.0, %v2440
    %v2444 = vmul.f32 %v2443, 1.442695
    %v2445 = vpow.pop %v2444
    %v2446 = vadd.f32 %v2445, 1.0
    %v2447 = vrcp.pop %v2446
    %v2448 = vmul.f32 1.0, %v2447
    %v2449 = vld [vmem:[%s9] sm:$0xff]
    %v2450 = vld [vmem:[%s9 + $0x8] sm:$0xff]
    %v2451 = vld [vmem:[%s9 + $0x10] sm:$0xff]
    %v2452 = vld [vmem:[%s9 + $0x18] sm:$0xff]
    %v2453 = vld [vmem:[%s9 + $0x20] sm:$0xff]
    %v2454 = vld [vmem:[%s9 + $0x28] sm:$0xff]
    %v2455 = vld [vmem:[%s9 + $0x30] sm:$0xff]
    %v2456 = vld [vmem:[%s9 + $0x38] sm:$0xff]
    %v2457 = vld [vmem:[%s9 + $0x40] sm:$0xff]
    %v2458 = vld [vmem:[%s9 + $0x48] sm:$0xff]
    %v2459 = vld [vmem:[%s9 + $0x50] sm:$0xff]
    %v2460 = vld [vmem:[%s9 + $0x58] sm:$0xff]
    %v2461 = vld [vmem:[%s9 + $0x60] sm:$0xff]
    %v2462 = vld [vmem:[%s9 + $0x68] sm:$0xff]
    %v2463 = vld [vmem:[%s9 + $0x70] sm:$0xff]
    %v2464 = vld [vmem:[%s9 + $0x78] sm:$0xff]
    %v2465 = vld [vmem:[%s10] sm:$0x1]
    %v2467 = vlaneseq
    %v2468 = vshrl.u32 %v2467, 7
    %v2469 = vsub.s32 0, %v2468
    %v2470 = vrot.slane %v2465, %v2469
    %2472 = vmatprep.subr.mxu0 0.0
    %2473 = vmatpush1.msra.mxu0 %v2449
    %2474 = vmatprep.subr.mxu0 0.0
    %2475 = vmatpush1.msra.mxu0 %v2450
    %2476 = vmatprep.subr.mxu0 0.0
    %2477 = vmatpush1.msra.mxu0 %v2451
    %2478 = vmatprep.subr.mxu0 0.0
    %2479 = vmatpush1.msra.mxu0 %v2452
    %2480 = vmatprep.subr.mxu0 0.0
    %2481 = vmatpush1.msra.mxu0 %v2453
    %2482 = vmatprep.subr.mxu0 0.0
    %2483 = vmatpush1.msra.mxu0 %v2454
    %2484 = vmatprep.subr.mxu0 0.0
    %2485 = vmatpush1.msra.mxu0 %v2455
    %2486 = vmatprep.subr.mxu0 0.0
    %2487 = vmatpush1.msra.mxu0 %v2456
    %2488 = vmatprep.subr.mxu0 0.0
    %2489 = vmatpush1.msra.mxu0 %v2457
    %2490 = vmatprep.subr.mxu0 0.0
    %2491 = vmatpush1.msra.mxu0 %v2458
    %2492 = vmatprep.subr.mxu0 0.0
    %2493 = vmatpush1.msra.mxu0 %v2459
    %2494 = vmatprep.subr.mxu0 0.0
    %2495 = vmatpush1.msra.mxu0 %v2460
    %2496 = vmatprep.subr.mxu0 0.0
    %2497 = vmatpush1.msra.mxu0 %v2461
    %2498 = vmatprep.subr.mxu0 0.0
    %2499 = vmatpush1.msra.mxu0 %v2462
    %2500 = vmatprep.subr.mxu0 0.0
    %2501 = vmatpush1.msra.mxu0 %v2463
    %2502 = vmatprep.subr.mxu0 0.0
    %2503 = vmatpush1.msra.mxu0 %v2464
    %2504 = vmatprep.subr.mxu0 0.0
    %2505 = vmatpush1.msra.mxu0 0.0
    %2506 = vmatprep.subr.mxu0 0.0
    %2507 = vmatpush1.msra.mxu0 0.0
    %2508 = vmatprep.subr.mxu0 0.0
    %2509 = vmatpush1.msra.mxu0 0.0
    %2510 = vmatprep.subr.mxu0 0.0
    %2511 = vmatpush1.msra.mxu0 0.0
    %2512 = vmatprep.subr.mxu0 0.0
    %2513 = vmatpush1.msra.mxu0 0.0
    %2514 = vmatprep.subr.mxu0 0.0
    %2515 = vmatpush1.msra.mxu0 0.0
    %2516 = vmatprep.subr.mxu0 0.0
    %2517 = vmatpush1.msra.mxu0 0.0
    %2518 = vmatprep.subr.mxu0 0.0
    %2519 = vmatpush1.msra.mxu0 0.0
    %2520 = vmatprep.subr.mxu0 0.0
    %2521 = vmatpush1.msra.mxu0 0.0
    %2522 = vmatprep.subr.mxu0 0.0
    %2523 = vmatpush1.msra.mxu0 0.0
    %2524 = vmatprep.subr.mxu0 0.0
    %2525 = vmatpush1.msra.mxu0 0.0
    %2526 = vmatprep.subr.mxu0 0.0
    %2527 = vmatpush1.msra.mxu0 0.0
    %2528 = vmatprep.subr.mxu0 0.0
    %2529 = vmatpush1.msra.mxu0 0.0
    %2530 = vmatprep.subr.mxu0 0.0
    %2531 = vmatpush1.msra.mxu0 0.0
    %2532 = vmatprep.subr.mxu0 0.0
    %2533 = vmatpush1.msra.mxu0 0.0
    %2534 = vmatprep.subr.mxu0 0.0
    %2535 = vmatpush1.msra.mxu0 0.0
    %2536 = vmatprep.mubr.f32.mxu0 0.0
    %2537 = vmatmul.mubr.f32.gmra.mrb[0].mxu0 %v2448
    %v2538 = vpop.f32.mrb[0].mxu0
    %v2539 = vadd.f32 %v2470, %v2538
    %v2540 = vpop.f32.mrb[0].mxu0
    %2541 = vdwg.mxu0
    %v2542 = vsub.f32 0.0, %v2539
    %v2543 = vmul.f32 %v2542, 1.442695
    %v2544 = vpow.pop %v2543
    %v2545 = vadd.f32 %v2544, 1.0
    %v2546 = vrcp.pop %v2545
    %v2547 = vmul.f32 1.0, %v2546
    %vm2548 = vcmask 58368
    %2549 = vst.msk [vmem:[#allocation7] sm:$0x3] %vm2548, %v2547
    // Predicated region
    $region46: #{benchmark_forward.1} parent=1 // pred_check
      _
    $region47: #{benchmark_forward.1} parent=1 // pred_check_branch
      %2551 = sbr.rel (0) target = $region49
    $region48: #{benchmark_forward.1} parent=1 // pred_region
      %s2553 = ssub.s32 32, 32
      %2554 = vsyncadd [#allocation8], %s2553
      %s2556 = sshll.u32 [#allocation7], 4
      %s2557 = int_to_ptr.vmem [resolvable:$true] %s2556
      %2559 = dma.vmem_to_hbm [thread:$0]  %s2557, 32, %s11, [#allocation8]
    $region49: #{benchmark_forward.1} parent=1 // pred_fallthru
      _
    // Predicated region
    $region50: #{benchmark_forward.1} parent=1 // pred_check
      _
    $region51: #{benchmark_forward.1} parent=1 // pred_check_branch
      %2561 = sbr.rel (0) target = $region53
    $region52: #{benchmark_forward.1} parent=1 // pred_region
      %2562 = dma.done [#allocation8], 32
    $region53: #{benchmark_forward.1} parent=1 // pred_fallthru
      _
    %2563 = vsyncpa [#allocation8], 1

</llo_original>
